<compile_context>
chip_gen: v5e
topology: v5e:2x2
jax: 0.10.0
libtpu: 0.0.40
codegen_flags: <defaults>
</compile_context>

<pallas_src>
import functools

import jax
import jax.numpy as jnp
from jax.experimental import pallas as pl
from jax.experimental.pallas import tpu as pltpu

LANE = 128
VMEM_LIMIT = 32 * 1024 * 1024  # explicit scoped-VMEM budget (safe on v5e/v6e/v7x)


def _round_up(x, m):
    return (x + m - 1) // m * m


# ----------------------------------------------------------------------------
# Pallas kernels
# ----------------------------------------------------------------------------

def _conv_taps_matmul_kernel(*refs, act, ntaps):
    """Fused conv-as-matmul over KH*KW taps: out = act(sum_t x_t @ w_t + b).

    refs = (tap_0, ..., tap_{ntaps-1}, w, b, out)
      tap_t : (TILE_M, Cin)          bf16
      w     : (ntaps, Cin, N_pad)    bf16   (resident across the M grid)
      b     : (1, N_pad)             f32
      out   : (TILE_M, N_pad)        f32    (lane-dense, N_pad % 128 == 0)
    """
    tap_refs = refs[:ntaps]
    w_ref = refs[ntaps]
    b_ref = refs[ntaps + 1]
    o_ref = refs[ntaps + 2]

    acc = jnp.dot(tap_refs[0][...], w_ref[0],
                  preferred_element_type=jnp.float32) + b_ref[...]
    for t in range(1, ntaps):
        acc = acc + jnp.dot(tap_refs[t][...], w_ref[t],
                            preferred_element_type=jnp.float32)
    if act == "relu":
        acc = jnp.maximum(acc, 0.0)
    o_ref[...] = acc.astype(o_ref.dtype)


def _gap_fc_kernel(x_ref, w_ref, b_ref, o_ref):
    """Global average pool over spatial axis then FC: x:(B, HW, C) -> (B, N_pad)."""
    pooled = jnp.mean(x_ref[...], axis=1)  # (B, C) f32
    o_ref[...] = (
        jnp.dot(pooled, w_ref[...], preferred_element_type=jnp.float32) + b_ref[...]
    ).astype(o_ref.dtype)


def _lstm2_linear_kernel(
    x_ref, h0_ref, c0_ref,
    wih0_ref, whh0_ref, b0_ref,
    wih1_ref, whh1_ref, b1_ref,
    wlin_ref, blin_ref,
    out_ref, h_out_ref, c_out_ref,
):
    """Single time-step of a 2-layer LSTM (PyTorch gate order i,f,g,o) + Linear.

    4*H == 128, so `gates` is exactly one 128-lane vreg row group: apply sigmoid and
    tanh full-width (2 EUP passes) and pick the g-block via a lane mask instead of
    four 32-lane sliced transcendentals.
    """
    H = whh0_ref.shape[0]

    def cell(x, h_prev, c_prev, wih_ref, whh_ref, b_ref):
        gates = (
            jnp.dot(x, wih_ref[...], preferred_element_type=jnp.float32)
            + jnp.dot(h_prev, whh_ref[...], preferred_element_type=jnp.float32)
            + b_ref[...]
        )  # (B, 4H)
        lane = jax.lax.broadcasted_iota(jnp.int32, gates.shape, 1)
        g_block = (lane >= 2 * H) & (lane < 3 * H)
        acts = jnp.where(g_block, jnp.tanh(gates), jax.nn.sigmoid(gates))
        i_g = acts[:, 0:H]
        f_g = acts[:, H:2 * H]
        g_g = acts[:, 2 * H:3 * H]
        o_g = acts[:, 3 * H:4 * H]
        c_new = f_g * c_prev + i_g * g_g
        h_new = o_g * jnp.tanh(c_new)
        return h_new, c_new

    x = x_ref[...]
    h1, c1 = cell(x, h0_ref[0], c0_ref[0], wih0_ref, whh0_ref, b0_ref)
    # TODO(synk): rnn_dropout_between / rnn_dropout_out are identity here (inference mode).
    h2, c2 = cell(h1, h0_ref[1], c0_ref[1], wih1_ref, whh1_ref, b1_ref)

    # Final Linear, output lane-padded to 128 (sliced to 12 in the wrapper).
    out_ref[...] = (
        jnp.dot(h2, wlin_ref[...], preferred_element_type=jnp.float32) + blin_ref[...]
    ).astype(out_ref.dtype)
    h_out_ref[0] = h1
    h_out_ref[1] = h2
    c_out_ref[0] = c1
    c_out_ref[1] = c2


# ----------------------------------------------------------------------------
# Conv wrapper: shifted taps (no im2col concat) + M-tiled fused Pallas matmul
# ----------------------------------------------------------------------------

def conv2d_pallas(x_nhwc, w_khkwcico, b, stride, pad, act="none", tile_m=512):
    N, H, W, Cin = x_nhwc.shape
    KH, KW, Cin2, Cout = w_khkwcico.shape
    assert Cin == Cin2
    OH = (H + 2 * pad - KH) // stride + 1
    OW = (W + 2 * pad - KW) // stride + 1
    M = N * OH * OW
    ntaps = KH * KW

    xp = jnp.pad(x_nhwc, ((0, 0), (pad, pad), (pad, pad), (0, 0)))
    taps = []
    for i in range(KH):
        for j in range(KW):
            t = xp[:, i:i + stride * OH:stride, j:j + stride * OW:stride, :]
            taps.append(t.reshape(M, Cin).astype(jnp.bfloat16))

    # Lane-dense output: pad Cout up to a multiple of 128.
    n_pad = _round_up(max(Cout, LANE), LANE)
    w_pad = jnp.zeros((ntaps, Cin, n_pad), jnp.bfloat16)
    w_pad = w_pad.at[:, :, :Cout].set(
        w_khkwcico.reshape(ntaps, Cin, Cout).astype(jnp.bfloat16))
    b_pad = jnp.zeros((1, n_pad), jnp.float32).at[:, :Cout].set(b)

    # M tiling (sublane-aligned); pad rows so the grid divides evenly.
    tm = min(tile_m, _round_up(M, 8))
    m_pad = _round_up(M, tm)
    if m_pad != M:
        taps = [jnp.pad(t, ((0, m_pad - M), (0, 0))) for t in taps]

    in_specs = [pl.BlockSpec((tm, Cin), lambda i: (i, 0)) for _ in range(ntaps)]
    in_specs += [
        pl.BlockSpec((ntaps, Cin, n_pad), lambda i: (0, 0, 0)),  # resident weights
        pl.BlockSpec((1, n_pad), lambda i: (0, 0)),              # resident bias
    ]

    y = pl.pallas_call(
        functools.partial(_conv_taps_matmul_kernel, act=act, ntaps=ntaps),
        out_shape=jax.ShapeDtypeStruct((m_pad, n_pad), jnp.float32),
        grid=(m_pad // tm,),
        in_specs=in_specs,
        out_specs=pl.BlockSpec((tm, n_pad), lambda i: (i, 0)),
        compiler_params=pltpu.CompilerParams(
            dimension_semantics=("parallel",),
            vmem_limit_bytes=VMEM_LIMIT,
        ),
    )(*taps, w_pad, b_pad)

    return y[:M, :Cout].reshape(N, OH, OW, Cout)


# ----------------------------------------------------------------------------
# Parameters (deterministic kaiming-normal init, biases zero, LSTM forget bias 1)
# ----------------------------------------------------------------------------

def _kaiming(key, shape, fan_in):
    return (jnp.sqrt(2.0 / fan_in) * jax.random.normal(key, shape)).astype(jnp.float32)


def init_params(key, feat=32, hid=32):
    ks = jax.random.split(key, 9)
    p = {}
    # FlowNet (approx): 6 -> 16 -> 2 (flow), each 3x3 stride 2
    p["fn_w1"] = _kaiming(ks[0], (3, 3, 6, 16), 3 * 3 * 6)
    p["fn_b1"] = jnp.zeros((16,), jnp.float32)
    p["fn_w2"] = _kaiming(ks[1], (3, 3, 16, 2), 3 * 3 * 16)
    p["fn_b2"] = jnp.zeros((2,), jnp.float32)
    # FlowPoseNet (approx): (flow 2 + intrinsic 2) -> 32 conv, GAP, FC -> feat
    p["fp_w1"] = _kaiming(ks[2], (3, 3, 4, 32), 3 * 3 * 4)
    p["fp_b1"] = jnp.zeros((32,), jnp.float32)
    p["fp_fcw"] = _kaiming(ks[3], (32, feat), 32)
    p["fp_fcb"] = jnp.zeros((feat,), jnp.float32)
    # 2-layer LSTM, gate order i,f,g,o; bias_hh forget block = 1.0 (as in __init__).
    # NOTE: bias_ih + bias_hh are folded into one vector per layer (checkpoint loaders
    # must sum the two PyTorch biases, applying the forget +1.0 exactly once).
    p["wih0"] = _kaiming(ks[4], (feat, 4 * hid), feat)
    p["whh0"] = _kaiming(ks[5], (hid, 4 * hid), hid)
    p["b0"] = jnp.zeros((4 * hid,), jnp.float32).at[hid:2 * hid].set(1.0).reshape(1, 4 * hid)
    p["wih1"] = _kaiming(ks[6], (hid, 4 * hid), hid)
    p["whh1"] = _kaiming(ks[7], (hid, 4 * hid), hid)
    p["b1"] = jnp.zeros((4 * hid,), jnp.float32).at[hid:2 * hid].set(1.0).reshape(1, 4 * hid)
    # final Linear: hid -> 12
    p["wlin"] = _kaiming(ks[8], (hid, 12), hid)
    p["blin"] = jnp.zeros((1, 12), jnp.float32)
    return p


# ----------------------------------------------------------------------------
# VONet forward paths
# ----------------------------------------------------------------------------

@jax.jit
def vonet_forward(params, img1, img2, intrinsic):
    """VONet.forward(x): flow = flowNet(x[0:2]); feature = flowPoseNet(cat(flow, x[2]))."""
    a = jnp.transpose(img1, (0, 2, 3, 1))  # NCHW -> NHWC (channels-last, lane-dense)
    b = jnp.transpose(img2, (0, 2, 3, 1))
    xin = jnp.concatenate([a, b], axis=-1)  # (B,H,W,6), matches the 6-ch cat in the module

    # FlowNet (approx)
    f1 = conv2d_pallas(xin, params["fn_w1"], params["fn_b1"], stride=2, pad=1, act="relu")
    flow = conv2d_pallas(f1, params["fn_w2"], params["fn_b2"], stride=2, pad=1, act="none")

    # cat flow with intrinsic layer along channels
    intr = jnp.transpose(intrinsic, (0, 2, 3, 1))
    flow_input = jnp.concatenate([flow, intr], axis=-1)  # (B, H/4, W/4, 4)

    # FlowPoseNet (approx): conv, then global-average-pool + FC fused in one kernel.
    # TODO(synk): fold the GAP/FC into the conv epilogue (per-tile partial sums) to
    #             drop the p1 HBM round-trip once the real FlowPoseNet is in place.
    p1 = conv2d_pallas(flow_input, params["fp_w1"], params["fp_b1"], stride=2, pad=1, act="relu")
    Bn, OH, OW, C = p1.shape
    feat_dim = params["fp_fcw"].shape[1]
    n_pad = _round_up(max(feat_dim, LANE), LANE)
    fcw_pad = jnp.zeros((C, n_pad), jnp.float32).at[:, :feat_dim].set(params["fp_fcw"])
    fcb_pad = jnp.zeros((1, n_pad), jnp.float32).at[:, :feat_dim].set(
        params["fp_fcb"].reshape(1, feat_dim))

    feature = pl.pallas_call(
        _gap_fc_kernel,
        out_shape=jax.ShapeDtypeStruct((Bn, n_pad), jnp.float32),
        in_specs=[pl.BlockSpec(memory_space=pltpu.MemorySpace.VMEM)] * 3,
        out_specs=pl.BlockSpec(memory_space=pltpu.MemorySpace.VMEM),
        compiler_params=pltpu.CompilerParams(vmem_limit_bytes=VMEM_LIMIT),
    )(p1.reshape(Bn, OH * OW, C), fcw_pad, fcb_pad)
    return feature[:, :feat_dim]


@jax.jit
def forward_one_ts(params, feature, lstm_init_state=None):
    """VONet.forward_one_ts: 2-layer LSTM (seq len 1) + dropout(eval) + Linear."""
    B = feature.shape[0]
    H = params["whh0"].shape[0]
    if lstm_init_state is None:
        h0 = jnp.zeros((2, B, H), jnp.float32)
        c0 = jnp.zeros((2, B, H), jnp.float32)
    else:
        # (B, 2, num_layers, H) -> (num_layers, B, H) for hidden / cell
        h0 = jnp.transpose(lstm_init_state[:, 0, :, :], (1, 0, 2))
        c0 = jnp.transpose(lstm_init_state[:, 1, :, :], (1, 0, 2))

    # Lane-pad the final Linear to 128 output lanes (sliced back to 12 below).
    n_pad = LANE
    wlin_pad = jnp.zeros((H, n_pad), jnp.float32).at[:, :12].set(params["wlin"])
    blin_pad = jnp.zeros((1, n_pad), jnp.float32).at[:, :12].set(params["blin"])

    # TODO(synk): at B=2 the sublane occupancy is 2/8; batching timesteps/requests into
    #             the leading dim is the way to recover MXU/VPU utilisation here.
    out_pad, h_out, c_out = pl.pallas_call(
        _lstm2_linear_kernel,
        out_shape=(
            jax.ShapeDtypeStruct((B, n_pad), jnp.float32),
            jax.ShapeDtypeStruct((2, B, H), jnp.float32),
            jax.ShapeDtypeStruct((2, B, H), jnp.float32),
        ),
        in_specs=[pl.BlockSpec(memory_space=pltpu.MemorySpace.VMEM)] * 11,
        out_specs=(
            pl.BlockSpec(memory_space=pltpu.MemorySpace.VMEM),
            pl.BlockSpec(memory_space=pltpu.MemorySpace.VMEM),
            pl.BlockSpec(memory_space=pltpu.MemorySpace.VMEM),
        ),
        compiler_params=pltpu.CompilerParams(vmem_limit_bytes=VMEM_LIMIT),
    )(
        feature, h0, c0,
        params["wih0"], params["whh0"], params["b0"],
        params["wih1"], params["whh1"], params["b1"],
        wlin_pad, blin_pad,
    )
    out = out_pad[:, :12]
    # torch.stack((h, c), dim=0).permute(2, 0, 1, 3) -> (B, 2, num_layers, H)
    lstm_state = jnp.stack([h_out, c_out], axis=0).transpose(2, 0, 1, 3)
    return out, lstm_state


# ----------------------------------------------------------------------------
# Demo
# ----------------------------------------------------------------------------

if __name__ == "__main__":
    B = 2
    H_IMG, W_IMG = 16, 16   # imsize1, imsize2
    HID = 32                # par.rnn_hidden_size
    FEAT = 32               # flowPoseNet feature dim (== LSTM input size, no EKF term)

    params = init_params(jax.random.PRNGKey(0), feat=FEAT, hid=HID)

    k1, k2, k3, k4 = jax.random.split(jax.random.PRNGKey(0), 4)
    img1 = jax.random.normal(k1, (B, 3, H_IMG, W_IMG), jnp.float32)
    img2 = jax.random.normal(k2, (B, 3, H_IMG, W_IMG), jnp.float32)
    intrinsic = jax.random.normal(k3, (B, 2, H_IMG // 4, W_IMG // 4), jnp.float32)
    lstm_init_state = jax.random.normal(k4, (B, 2, 2, HID), jnp.float32)

    feature = vonet_forward(params, img1, img2, intrinsic)
    out, lstm_state = forward_one_ts(params, feature, lstm_init_state)
    jax.block_until_ready((feature, out, lstm_state))

    assert feature.shape == (B, FEAT)
    assert out.shape == (B, 12)
    assert lstm_state.shape == (B, 2, 2, HID)
    assert bool(jnp.all(jnp.isfinite(feature)))
    assert bool(jnp.all(jnp.isfinite(out)))
    assert bool(jnp.all(jnp.isfinite(lstm_state)))
    print("KERNEL_OK")
</pallas_src>

<mosaic_0001>
module attributes {stable_mosaic.version = 11 : i64} {
  func.func @_conv_taps_matmul_kernel(%arg0: i32, %arg1: memref<128x6xbf16, #tpu.memory_space<vmem>>, %arg2: memref<128x6xbf16, #tpu.memory_space<vmem>>, %arg3: memref<128x6xbf16, #tpu.memory_space<vmem>>, %arg4: memref<128x6xbf16, #tpu.memory_space<vmem>>, %arg5: memref<128x6xbf16, #tpu.memory_space<vmem>>, %arg6: memref<128x6xbf16, #tpu.memory_space<vmem>>, %arg7: memref<128x6xbf16, #tpu.memory_space<vmem>>, %arg8: memref<128x6xbf16, #tpu.memory_space<vmem>>, %arg9: memref<128x6xbf16, #tpu.memory_space<vmem>>, %arg10: memref<9x6x128xbf16, #tpu.memory_space<vmem>>, %arg11: memref<1x128xf32, #tpu.memory_space<vmem>>, %arg12: memref<128x128xf32, #tpu.memory_space<vmem>>) attributes {dimension_semantics = [#tpu.dimension_semantics<parallel>], iteration_bounds = array<i64: 1>, scalar_prefetch = 0 : i64, scratch_operands = 0 : i64, tpu.core_type = #tpu.core_type<tc>, window_params = [{transform_indices = @transform_0, window_bounds = array<i64: 128, 6>}, {transform_indices = @transform_1, window_bounds = array<i64: 128, 6>}, {transform_indices = @transform_2, window_bounds = array<i64: 128, 6>}, {transform_indices = @transform_3, window_bounds = array<i64: 128, 6>}, {transform_indices = @transform_4, window_bounds = array<i64: 128, 6>}, {transform_indices = @transform_5, window_bounds = array<i64: 128, 6>}, {transform_indices = @transform_6, window_bounds = array<i64: 128, 6>}, {transform_indices = @transform_7, window_bounds = array<i64: 128, 6>}, {transform_indices = @transform_8, window_bounds = array<i64: 128, 6>}, {pipeline_mode = #tpu.pipeline_mode<synchronous>, transform_indices = @transform_9, window_bounds = array<i64: 9, 6, 128>}, {pipeline_mode = #tpu.pipeline_mode<synchronous>, transform_indices = @transform_10, window_bounds = array<i64: 1, 128>}, {transform_indices = @transform_11, window_bounds = array<i64: 128, 128>}]} {
    %c0 = arith.constant 0 : index
    %c0_0 = arith.constant 0 : index
    %0 = vector.load %arg1[%c0, %c0_0] : memref<128x6xbf16, #tpu.memory_space<vmem>>, vector<128x6xbf16>
    %c0_1 = arith.constant 0 : index
    %c0_2 = arith.constant 0 : index
    %c0_3 = arith.constant 0 : index
    %1 = vector.load %arg10[%c0_1, %c0_2, %c0_3] : memref<9x6x128xbf16, #tpu.memory_space<vmem>>, vector<1x6x128xbf16>
    %2 = vector.shape_cast %1 : vector<1x6x128xbf16> to vector<6x128xbf16>
    %cst = arith.constant dense<0.000000e+00> : vector<128x128xf32>
    %3 = tpu.matmul %0, %2, %cst {dimension_numbers = #tpu.dot_dimension_numbers<[1], [0], [0], [1], [0, 0, 1, 1], [], []>} : vector<128x6xbf16>, vector<6x128xbf16>, vector<128x128xf32> -> vector<128x128xf32>
    %c0_4 = arith.constant 0 : index
    %c0_5 = arith.constant 0 : index
    %4 = vector.load %arg11[%c0_4, %c0_5] : memref<1x128xf32, #tpu.memory_space<vmem>>, vector<1x128xf32>
    %5 = vector.broadcast %4 : vector<1x128xf32> to vector<128x128xf32>
    %6 = arith.addf %3, %5 : vector<128x128xf32>
    %c0_6 = arith.constant 0 : index
    %c0_7 = arith.constant 0 : index
    %7 = vector.load %arg2[%c0_6, %c0_7] : memref<128x6xbf16, #tpu.memory_space<vmem>>, vector<128x6xbf16>
    %c1 = arith.constant 1 : index
    %c0_8 = arith.constant 0 : index
    %c0_9 = arith.constant 0 : index
    %8 = vector.load %arg10[%c1, %c0_8, %c0_9] : memref<9x6x128xbf16, #tpu.memory_space<vmem>>, vector<1x6x128xbf16>
    %9 = vector.shape_cast %8 : vector<1x6x128xbf16> to vector<6x128xbf16>
    %cst_10 = arith.constant dense<0.000000e+00> : vector<128x128xf32>
    %10 = tpu.matmul %7, %9, %cst_10 {dimension_numbers = #tpu.dot_dimension_numbers<[1], [0], [0], [1], [0, 0, 1, 1], [], []>} : vector<128x6xbf16>, vector<6x128xbf16>, vector<128x128xf32> -> vector<128x128xf32>
    %11 = arith.addf %6, %10 : vector<128x128xf32>
    %c0_11 = arith.constant 0 : index
    %c0_12 = arith.constant 0 : index
    %12 = vector.load %arg3[%c0_11, %c0_12] : memref<128x6xbf16, #tpu.memory_space<vmem>>, vector<128x6xbf16>
    %c2 = arith.constant 2 : index
    %c0_13 = arith.constant 0 : index
    %c0_14 = arith.constant 0 : index
    %13 = vector.load %arg10[%c2, %c0_13, %c0_14] : memref<9x6x128xbf16, #tpu.memory_space<vmem>>, vector<1x6x128xbf16>
    %14 = vector.shape_cast %13 : vector<1x6x128xbf16> to vector<6x128xbf16>
    %cst_15 = arith.constant dense<0.000000e+00> : vector<128x128xf32>
    %15 = tpu.matmul %12, %14, %cst_15 {dimension_numbers = #tpu.dot_dimension_numbers<[1], [0], [0], [1], [0, 0, 1, 1], [], []>} : vector<128x6xbf16>, vector<6x128xbf16>, vector<128x128xf32> -> vector<128x128xf32>
    %16 = arith.addf %11, %15 : vector<128x128xf32>
    %c0_16 = arith.constant 0 : index
    %c0_17 = arith.constant 0 : index
    %17 = vector.load %arg4[%c0_16, %c0_17] : memref<128x6xbf16, #tpu.memory_space<vmem>>, vector<128x6xbf16>
    %c3 = arith.constant 3 : index
    %c0_18 = arith.constant 0 : index
    %c0_19 = arith.constant 0 : index
    %18 = vector.load %arg10[%c3, %c0_18, %c0_19] : memref<9x6x128xbf16, #tpu.memory_space<vmem>>, vector<1x6x128xbf16>
    %19 = vector.shape_cast %18 : vector<1x6x128xbf16> to vector<6x128xbf16>
    %cst_20 = arith.constant dense<0.000000e+00> : vector<128x128xf32>
    %20 = tpu.matmul %17, %19, %cst_20 {dimension_numbers = #tpu.dot_dimension_numbers<[1], [0], [0], [1], [0, 0, 1, 1], [], []>} : vector<128x6xbf16>, vector<6x128xbf16>, vector<128x128xf32> -> vector<128x128xf32>
    %21 = arith.addf %16, %20 : vector<128x128xf32>
    %c0_21 = arith.constant 0 : index
    %c0_22 = arith.constant 0 : index
    %22 = vector.load %arg5[%c0_21, %c0_22] : memref<128x6xbf16, #tpu.memory_space<vmem>>, vector<128x6xbf16>
    %c4 = arith.constant 4 : index
    %c0_23 = arith.constant 0 : index
    %c0_24 = arith.constant 0 : index
    %23 = vector.load %arg10[%c4, %c0_23, %c0_24] : memref<9x6x128xbf16, #tpu.memory_space<vmem>>, vector<1x6x128xbf16>
    %24 = vector.shape_cast %23 : vector<1x6x128xbf16> to vector<6x128xbf16>
    %cst_25 = arith.constant dense<0.000000e+00> : vector<128x128xf32>
    %25 = tpu.matmul %22, %24, %cst_25 {dimension_numbers = #tpu.dot_dimension_numbers<[1], [0], [0], [1], [0, 0, 1, 1], [], []>} : vector<128x6xbf16>, vector<6x128xbf16>, vector<128x128xf32> -> vector<128x128xf32>
    %26 = arith.addf %21, %25 : vector<128x128xf32>
    %c0_26 = arith.constant 0 : index
    %c0_27 = arith.constant 0 : index
    %27 = vector.load %arg6[%c0_26, %c0_27] : memref<128x6xbf16, #tpu.memory_space<vmem>>, vector<128x6xbf16>
    %c5 = arith.constant 5 : index
    %c0_28 = arith.constant 0 : index
    %c0_29 = arith.constant 0 : index
    %28 = vector.load %arg10[%c5, %c0_28, %c0_29] : memref<9x6x128xbf16, #tpu.memory_space<vmem>>, vector<1x6x128xbf16>
    %29 = vector.shape_cast %28 : vector<1x6x128xbf16> to vector<6x128xbf16>
    %cst_30 = arith.constant dense<0.000000e+00> : vector<128x128xf32>
    %30 = tpu.matmul %27, %29, %cst_30 {dimension_numbers = #tpu.dot_dimension_numbers<[1], [0], [0], [1], [0, 0, 1, 1], [], []>} : vector<128x6xbf16>, vector<6x128xbf16>, vector<128x128xf32> -> vector<128x128xf32>
    %31 = arith.addf %26, %30 : vector<128x128xf32>
    %c0_31 = arith.constant 0 : index
    %c0_32 = arith.constant 0 : index
    %32 = vector.load %arg7[%c0_31, %c0_32] : memref<128x6xbf16, #tpu.memory_space<vmem>>, vector<128x6xbf16>
    %c6 = arith.constant 6 : index
    %c0_33 = arith.constant 0 : index
    %c0_34 = arith.constant 0 : index
    %33 = vector.load %arg10[%c6, %c0_33, %c0_34] : memref<9x6x128xbf16, #tpu.memory_space<vmem>>, vector<1x6x128xbf16>
    %34 = vector.shape_cast %33 : vector<1x6x128xbf16> to vector<6x128xbf16>
    %cst_35 = arith.constant dense<0.000000e+00> : vector<128x128xf32>
    %35 = tpu.matmul %32, %34, %cst_35 {dimension_numbers = #tpu.dot_dimension_numbers<[1], [0], [0], [1], [0, 0, 1, 1], [], []>} : vector<128x6xbf16>, vector<6x128xbf16>, vector<128x128xf32> -> vector<128x128xf32>
    %36 = arith.addf %31, %35 : vector<128x128xf32>
    %c0_36 = arith.constant 0 : index
    %c0_37 = arith.constant 0 : index
    %37 = vector.load %arg8[%c0_36, %c0_37] : memref<128x6xbf16, #tpu.memory_space<vmem>>, vector<128x6xbf16>
    %c7 = arith.constant 7 : index
    %c0_38 = arith.constant 0 : index
    %c0_39 = arith.constant 0 : index
    %38 = vector.load %arg10[%c7, %c0_38, %c0_39] : memref<9x6x128xbf16, #tpu.memory_space<vmem>>, vector<1x6x128xbf16>
    %39 = vector.shape_cast %38 : vector<1x6x128xbf16> to vector<6x128xbf16>
    %cst_40 = arith.constant dense<0.000000e+00> : vector<128x128xf32>
    %40 = tpu.matmul %37, %39, %cst_40 {dimension_numbers = #tpu.dot_dimension_numbers<[1], [0], [0], [1], [0, 0, 1, 1], [], []>} : vector<128x6xbf16>, vector<6x128xbf16>, vector<128x128xf32> -> vector<128x128xf32>
    %41 = arith.addf %36, %40 : vector<128x128xf32>
    %c0_41 = arith.constant 0 : index
    %c0_42 = arith.constant 0 : index
    %42 = vector.load %arg9[%c0_41, %c0_42] : memref<128x6xbf16, #tpu.memory_space<vmem>>, vector<128x6xbf16>
    %c8 = arith.constant 8 : index
    %c0_43 = arith.constant 0 : index
    %c0_44 = arith.constant 0 : index
    %43 = vector.load %arg10[%c8, %c0_43, %c0_44] : memref<9x6x128xbf16, #tpu.memory_space<vmem>>, vector<1x6x128xbf16>
    %44 = vector.shape_cast %43 : vector<1x6x128xbf16> to vector<6x128xbf16>
    %cst_45 = arith.constant dense<0.000000e+00> : vector<128x128xf32>
    %45 = tpu.matmul %42, %44, %cst_45 {dimension_numbers = #tpu.dot_dimension_numbers<[1], [0], [0], [1], [0, 0, 1, 1], [], []>} : vector<128x6xbf16>, vector<6x128xbf16>, vector<128x128xf32> -> vector<128x128xf32>
    %46 = arith.addf %41, %45 : vector<128x128xf32>
    %cst_46 = arith.constant 0.000000e+00 : f32
    %47 = vector.broadcast %cst_46 : f32 to vector<128x128xf32>
    %48 = arith.maximumf %46, %47 : vector<128x128xf32>
    %c0_47 = arith.constant 0 : index
    %c0_48 = arith.constant 0 : index
    %49 = vector.load %arg12[%c0_47, %c0_48] : memref<128x128xf32, #tpu.memory_space<vmem>>, vector<128x128xf32>
    tpu.vector_store %arg12[%c0_47, %c0_48], %48 {strides = array<i32>} : memref<128x128xf32, #tpu.memory_space<vmem>>, vector<128x128xf32>,
    return
  }
  func.func @transform_0(%arg0: i32) -> (i32, i32) {
    %c0_i32 = arith.constant 0 : i32
    %c0_i32_0 = arith.constant 0 : i32
    return %arg0, %c0_i32 : i32, i32
  }
  func.func @transform_1(%arg0: i32) -> (i32, i32) {
    %c0_i32 = arith.constant 0 : i32
    %c0_i32_0 = arith.constant 0 : i32
    return %arg0, %c0_i32 : i32, i32
  }
  func.func @transform_2(%arg0: i32) -> (i32, i32) {
    %c0_i32 = arith.constant 0 : i32
    %c0_i32_0 = arith.constant 0 : i32
    return %arg0, %c0_i32 : i32, i32
  }
  func.func @transform_3(%arg0: i32) -> (i32, i32) {
    %c0_i32 = arith.constant 0 : i32
    %c0_i32_0 = arith.constant 0 : i32
    return %arg0, %c0_i32 : i32, i32
  }
  func.func @transform_4(%arg0: i32) -> (i32, i32) {
    %c0_i32 = arith.constant 0 : i32
    %c0_i32_0 = arith.constant 0 : i32
    return %arg0, %c0_i32 : i32, i32
  }
  func.func @transform_5(%arg0: i32) -> (i32, i32) {
    %c0_i32 = arith.constant 0 : i32
    %c0_i32_0 = arith.constant 0 : i32
    return %arg0, %c0_i32 : i32, i32
  }
  func.func @transform_6(%arg0: i32) -> (i32, i32) {
    %c0_i32 = arith.constant 0 : i32
    %c0_i32_0 = arith.constant 0 : i32
    return %arg0, %c0_i32 : i32, i32
  }
  func.func @transform_7(%arg0: i32) -> (i32, i32) {
    %c0_i32 = arith.constant 0 : i32
    %c0_i32_0 = arith.constant 0 : i32
    return %arg0, %c0_i32 : i32, i32
  }
  func.func @transform_8(%arg0: i32) -> (i32, i32) {
    %c0_i32 = arith.constant 0 : i32
    %c0_i32_0 = arith.constant 0 : i32
    return %arg0, %c0_i32 : i32, i32
  }
  func.func @transform_9(%arg0: i32) -> (i32, i32, i32) {
    %c0_i32 = arith.constant 0 : i32
    %c0_i32_0 = arith.constant 0 : i32
    %c0_i32_1 = arith.constant 0 : i32
    %c0_i32_2 = arith.constant 0 : i32
    return %c0_i32, %c0_i32_0, %c0_i32_1 : i32, i32, i32
  }
  func.func @transform_10(%arg0: i32) -> (i32, i32) {
    %c0_i32 = arith.constant 0 : i32
    %c0_i32_0 = arith.constant 0 : i32
    %c0_i32_1 = arith.constant 0 : i32
    return %c0_i32, %c0_i32_0 : i32, i32
  }
  func.func @transform_11(%arg0: i32) -> (i32, i32) {
    %c0_i32 = arith.constant 0 : i32
    %c0_i32_0 = arith.constant 0 : i32
    return %arg0, %c0_i32 : i32, i32
  }
}

module attributes {stable_mosaic.version = 11 : i64} {
  func.func @_conv_taps_matmul_kernel(%arg0: i32, %arg1: memref<32x16xbf16, #tpu.memory_space<vmem>>, %arg2: memref<32x16xbf16, #tpu.memory_space<vmem>>, %arg3: memref<32x16xbf16, #tpu.memory_space<vmem>>, %arg4: memref<32x16xbf16, #tpu.memory_space<vmem>>, %arg5: memref<32x16xbf16, #tpu.memory_space<vmem>>, %arg6: memref<32x16xbf16, #tpu.memory_space<vmem>>, %arg7: memref<32x16xbf16, #tpu.memory_space<vmem>>, %arg8: memref<32x16xbf16, #tpu.memory_space<vmem>>, %arg9: memref<32x16xbf16, #tpu.memory_space<vmem>>, %arg10: memref<9x16x128xbf16, #tpu.memory_space<vmem>>, %arg11: memref<1x128xf32, #tpu.memory_space<vmem>>, %arg12: memref<32x128xf32, #tpu.memory_space<vmem>>) attributes {dimension_semantics = [#tpu.dimension_semantics<parallel>], iteration_bounds = array<i64: 1>, scalar_prefetch = 0 : i64, scratch_operands = 0 : i64, tpu.core_type = #tpu.core_type<tc>, window_params = [{transform_indices = @transform_0, window_bounds = array<i64: 32, 16>}, {transform_indices = @transform_1, window_bounds = array<i64: 32, 16>}, {transform_indices = @transform_2, window_bounds = array<i64: 32, 16>}, {transform_indices = @transform_3, window_bounds = array<i64: 32, 16>}, {transform_indices = @transform_4, window_bounds = array<i64: 32, 16>}, {transform_indices = @transform_5, window_bounds = array<i64: 32, 16>}, {transform_indices = @transform_6, window_bounds = array<i64: 32, 16>}, {transform_indices = @transform_7, window_bounds = array<i64: 32, 16>}, {transform_indices = @transform_8, window_bounds = array<i64: 32, 16>}, {pipeline_mode = #tpu.pipeline_mode<synchronous>, transform_indices = @transform_9, window_bounds = array<i64: 9, 16, 128>}, {pipeline_mode = #tpu.pipeline_mode<synchronous>, transform_indices = @transform_10, window_bounds = array<i64: 1, 128>}, {transform_indices = @transform_11, window_bounds = array<i64: 32, 128>}]} {
    %c0 = arith.constant 0 : index
    %c0_0 = arith.constant 0 : index
    %0 = vector.load %arg1[%c0, %c0_0] : memref<32x16xbf16, #tpu.memory_space<vmem>>, vector<32x16xbf16>
    %c0_1 = arith.constant 0 : index
    %c0_2 = arith.constant 0 : index
    %c0_3 = arith.constant 0 : index
    %1 = vector.load %arg10[%c0_1, %c0_2, %c0_3] : memref<9x16x128xbf16, #tpu.memory_space<vmem>>, vector<1x16x128xbf16>
    %2 = vector.shape_cast %1 : vector<1x16x128xbf16> to vector<16x128xbf16>
    %cst = arith.constant dense<0.000000e+00> : vector<32x128xf32>
    %3 = tpu.matmul %0, %2, %cst {dimension_numbers = #tpu.dot_dimension_numbers<[1], [0], [0], [1], [0, 0, 1, 1], [], []>} : vector<32x16xbf16>, vector<16x128xbf16>, vector<32x128xf32> -> vector<32x128xf32>
    %c0_4 = arith.constant 0 : index
    %c0_5 = arith.constant 0 : index
    %4 = vector.load %arg11[%c0_4, %c0_5] : memref<1x128xf32, #tpu.memory_space<vmem>>, vector<1x128xf32>
    %5 = vector.broadcast %4 : vector<1x128xf32> to vector<32x128xf32>
    %6 = arith.addf %3, %5 : vector<32x128xf32>
    %c0_6 = arith.constant 0 : index
    %c0_7 = arith.constant 0 : index
    %7 = vector.load %arg2[%c0_6, %c0_7] : memref<32x16xbf16, #tpu.memory_space<vmem>>, vector<32x16xbf16>
    %c1 = arith.constant 1 : index
    %c0_8 = arith.constant 0 : index
    %c0_9 = arith.constant 0 : index
    %8 = vector.load %arg10[%c1, %c0_8, %c0_9] : memref<9x16x128xbf16, #tpu.memory_space<vmem>>, vector<1x16x128xbf16>
    %9 = vector.shape_cast %8 : vector<1x16x128xbf16> to vector<16x128xbf16>
    %cst_10 = arith.constant dense<0.000000e+00> : vector<32x128xf32>
    %10 = tpu.matmul %7, %9, %cst_10 {dimension_numbers = #tpu.dot_dimension_numbers<[1], [0], [0], [1], [0, 0, 1, 1], [], []>} : vector<32x16xbf16>, vector<16x128xbf16>, vector<32x128xf32> -> vector<32x128xf32>
    %11 = arith.addf %6, %10 : vector<32x128xf32>
    %c0_11 = arith.constant 0 : index
    %c0_12 = arith.constant 0 : index
    %12 = vector.load %arg3[%c0_11, %c0_12] : memref<32x16xbf16, #tpu.memory_space<vmem>>, vector<32x16xbf16>
    %c2 = arith.constant 2 : index
    %c0_13 = arith.constant 0 : index
    %c0_14 = arith.constant 0 : index
    %13 = vector.load %arg10[%c2, %c0_13, %c0_14] : memref<9x16x128xbf16, #tpu.memory_space<vmem>>, vector<1x16x128xbf16>
    %14 = vector.shape_cast %13 : vector<1x16x128xbf16> to vector<16x128xbf16>
    %cst_15 = arith.constant dense<0.000000e+00> : vector<32x128xf32>
    %15 = tpu.matmul %12, %14, %cst_15 {dimension_numbers = #tpu.dot_dimension_numbers<[1], [0], [0], [1], [0, 0, 1, 1], [], []>} : vector<32x16xbf16>, vector<16x128xbf16>, vector<32x128xf32> -> vector<32x128xf32>
    %16 = arith.addf %11, %15 : vector<32x128xf32>
    %c0_16 = arith.constant 0 : index
    %c0_17 = arith.constant 0 : index
    %17 = vector.load %arg4[%c0_16, %c0_17] : memref<32x16xbf16, #tpu.memory_space<vmem>>, vector<32x16xbf16>
    %c3 = arith.constant 3 : index
    %c0_18 = arith.constant 0 : index
    %c0_19 = arith.constant 0 : index
    %18 = vector.load %arg10[%c3, %c0_18, %c0_19] : memref<9x16x128xbf16, #tpu.memory_space<vmem>>, vector<1x16x128xbf16>
    %19 = vector.shape_cast %18 : vector<1x16x128xbf16> to vector<16x128xbf16>
    %cst_20 = arith.constant dense<0.000000e+00> : vector<32x128xf32>
    %20 = tpu.matmul %17, %19, %cst_20 {dimension_numbers = #tpu.dot_dimension_numbers<[1], [0], [0], [1], [0, 0, 1, 1], [], []>} : vector<32x16xbf16>, vector<16x128xbf16>, vector<32x128xf32> -> vector<32x128xf32>
    %21 = arith.addf %16, %20 : vector<32x128xf32>
    %c0_21 = arith.constant 0 : index
    %c0_22 = arith.constant 0 : index
    %22 = vector.load %arg5[%c0_21, %c0_22] : memref<32x16xbf16, #tpu.memory_space<vmem>>, vector<32x16xbf16>
    %c4 = arith.constant 4 : index
    %c0_23 = arith.constant 0 : index
    %c0_24 = arith.constant 0 : index
    %23 = vector.load %arg10[%c4, %c0_23, %c0_24] : memref<9x16x128xbf16, #tpu.memory_space<vmem>>, vector<1x16x128xbf16>
    %24 = vector.shape_cast %23 : vector<1x16x128xbf16> to vector<16x128xbf16>
    %cst_25 = arith.constant dense<0.000000e+00> : vector<32x128xf32>
    %25 = tpu.matmul %22, %24, %cst_25 {dimension_numbers = #tpu.dot_dimension_numbers<[1], [0], [0], [1], [0, 0, 1, 1], [], []>} : vector<32x16xbf16>, vector<16x128xbf16>, vector<32x128xf32> -> vector<32x128xf32>
    %26 = arith.addf %21, %25 : vector<32x128xf32>
    %c0_26 = arith.constant 0 : index
    %c0_27 = arith.constant 0 : index
    %27 = vector.load %arg6[%c0_26, %c0_27] : memref<32x16xbf16, #tpu.memory_space<vmem>>, vector<32x16xbf16>
    %c5 = arith.constant 5 : index
    %c0_28 = arith.constant 0 : index
    %c0_29 = arith.constant 0 : index
    %28 = vector.load %arg10[%c5, %c0_28, %c0_29] : memref<9x16x128xbf16, #tpu.memory_space<vmem>>, vector<1x16x128xbf16>
    %29 = vector.shape_cast %28 : vector<1x16x128xbf16> to vector<16x128xbf16>
    %cst_30 = arith.constant dense<0.000000e+00> : vector<32x128xf32>
    %30 = tpu.matmul %27, %29, %cst_30 {dimension_numbers = #tpu.dot_dimension_numbers<[1], [0], [0], [1], [0, 0, 1, 1], [], []>} : vector<32x16xbf16>, vector<16x128xbf16>, vector<32x128xf32> -> vector<32x128xf32>
    %31 = arith.addf %26, %30 : vector<32x128xf32>
    %c0_31 = arith.constant 0 : index
    %c0_32 = arith.constant 0 : index
    %32 = vector.load %arg7[%c0_31, %c0_32] : memref<32x16xbf16, #tpu.memory_space<vmem>>, vector<32x16xbf16>
    %c6 = arith.constant 6 : index
    %c0_33 = arith.constant 0 : index
    %c0_34 = arith.constant 0 : index
    %33 = vector.load %arg10[%c6, %c0_33, %c0_34] : memref<9x16x128xbf16, #tpu.memory_space<vmem>>, vector<1x16x128xbf16>
    %34 = vector.shape_cast %33 : vector<1x16x128xbf16> to vector<16x128xbf16>
    %cst_35 = arith.constant dense<0.000000e+00> : vector<32x128xf32>
    %35 = tpu.matmul %32, %34, %cst_35 {dimension_numbers = #tpu.dot_dimension_numbers<[1], [0], [0], [1], [0, 0, 1, 1], [], []>} : vector<32x16xbf16>, vector<16x128xbf16>, vector<32x128xf32> -> vector<32x128xf32>
    %36 = arith.addf %31, %35 : vector<32x128xf32>
    %c0_36 = arith.constant 0 : index
    %c0_37 = arith.constant 0 : index
    %37 = vector.load %arg8[%c0_36, %c0_37] : memref<32x16xbf16, #tpu.memory_space<vmem>>, vector<32x16xbf16>
    %c7 = arith.constant 7 : index
    %c0_38 = arith.constant 0 : index
    %c0_39 = arith.constant 0 : index
    %38 = vector.load %arg10[%c7, %c0_38, %c0_39] : memref<9x16x128xbf16, #tpu.memory_space<vmem>>, vector<1x16x128xbf16>
    %39 = vector.shape_cast %38 : vector<1x16x128xbf16> to vector<16x128xbf16>
    %cst_40 = arith.constant dense<0.000000e+00> : vector<32x128xf32>
    %40 = tpu.matmul %37, %39, %cst_40 {dimension_numbers = #tpu.dot_dimension_numbers<[1], [0], [0], [1], [0, 0, 1, 1], [], []>} : vector<32x16xbf16>, vector<16x128xbf16>, vector<32x128xf32> -> vector<32x128xf32>
    %41 = arith.addf %36, %40 : vector<32x128xf32>
    %c0_41 = arith.constant 0 : index
    %c0_42 = arith.constant 0 : index
    %42 = vector.load %arg9[%c0_41, %c0_42] : memref<32x16xbf16, #tpu.memory_space<vmem>>, vector<32x16xbf16>
    %c8 = arith.constant 8 : index
    %c0_43 = arith.constant 0 : index
    %c0_44 = arith.constant 0 : index
    %43 = vector.load %arg10[%c8, %c0_43, %c0_44] : memref<9x16x128xbf16, #tpu.memory_space<vmem>>, vector<1x16x128xbf16>
    %44 = vector.shape_cast %43 : vector<1x16x128xbf16> to vector<16x128xbf16>
    %cst_45 = arith.constant dense<0.000000e+00> : vector<32x128xf32>
    %45 = tpu.matmul %42, %44, %cst_45 {dimension_numbers = #tpu.dot_dimension_numbers<[1], [0], [0], [1], [0, 0, 1, 1], [], []>} : vector<32x16xbf16>, vector<16x128xbf16>, vector<32x128xf32> -> vector<32x128xf32>
    %46 = arith.addf %41, %45 : vector<32x128xf32>
    %c0_46 = arith.constant 0 : index
    %c0_47 = arith.constant 0 : index
    %47 = vector.load %arg12[%c0_46, %c0_47] : memref<32x128xf32, #tpu.memory_space<vmem>>, vector<32x128xf32>
    tpu.vector_store %arg12[%c0_46, %c0_47], %46 {strides = array<i32>} : memref<32x128xf32, #tpu.memory_space<vmem>>, vector<32x128xf32>,
    return
  }
  func.func @transform_0(%arg0: i32) -> (i32, i32) {
    %c0_i32 = arith.constant 0 : i32
    %c0_i32_0 = arith.constant 0 : i32
    return %arg0, %c0_i32 : i32, i32
  }
  func.func @transform_1(%arg0: i32) -> (i32, i32) {
    %c0_i32 = arith.constant 0 : i32
    %c0_i32_0 = arith.constant 0 : i32
    return %arg0, %c0_i32 : i32, i32
  }
  func.func @transform_2(%arg0: i32) -> (i32, i32) {
    %c0_i32 = arith.constant 0 : i32
    %c0_i32_0 = arith.constant 0 : i32
    return %arg0, %c0_i32 : i32, i32
  }
  func.func @transform_3(%arg0: i32) -> (i32, i32) {
    %c0_i32 = arith.constant 0 : i32
    %c0_i32_0 = arith.constant 0 : i32
    return %arg0, %c0_i32 : i32, i32
  }
  func.func @transform_4(%arg0: i32) -> (i32, i32) {
    %c0_i32 = arith.constant 0 : i32
    %c0_i32_0 = arith.constant 0 : i32
    return %arg0, %c0_i32 : i32, i32
  }
  func.func @transform_5(%arg0: i32) -> (i32, i32) {
    %c0_i32 = arith.constant 0 : i32
    %c0_i32_0 = arith.constant 0 : i32
    return %arg0, %c0_i32 : i32, i32
  }
  func.func @transform_6(%arg0: i32) -> (i32, i32) {
    %c0_i32 = arith.constant 0 : i32
    %c0_i32_0 = arith.constant 0 : i32
    return %arg0, %c0_i32 : i32, i32
  }
  func.func @transform_7(%arg0: i32) -> (i32, i32) {
    %c0_i32 = arith.constant 0 : i32
    %c0_i32_0 = arith.constant 0 : i32
    return %arg0, %c0_i32 : i32, i32
  }
  func.func @transform_8(%arg0: i32) -> (i32, i32) {
    %c0_i32 = arith.constant 0 : i32
    %c0_i32_0 = arith.constant 0 : i32
    return %arg0, %c0_i32 : i32, i32
  }
  func.func @transform_9(%arg0: i32) -> (i32, i32, i32) {
    %c0_i32 = arith.constant 0 : i32
    %c0_i32_0 = arith.constant 0 : i32
    %c0_i32_1 = arith.constant 0 : i32
    %c0_i32_2 = arith.constant 0 : i32
    return %c0_i32, %c0_i32_0, %c0_i32_1 : i32, i32, i32
  }
  func.func @transform_10(%arg0: i32) -> (i32, i32) {
    %c0_i32 = arith.constant 0 : i32
    %c0_i32_0 = arith.constant 0 : i32
    %c0_i32_1 = arith.constant 0 : i32
    return %c0_i32, %c0_i32_0 : i32, i32
  }
  func.func @transform_11(%arg0: i32) -> (i32, i32) {
    %c0_i32 = arith.constant 0 : i32
    %c0_i32_0 = arith.constant 0 : i32
    return %arg0, %c0_i32 : i32, i32
  }
}

module attributes {stable_mosaic.version = 11 : i64} {
  func.func @_conv_taps_matmul_kernel(%arg0: i32, %arg1: memref<8x4xbf16, #tpu.memory_space<vmem>>, %arg2: memref<8x4xbf16, #tpu.memory_space<vmem>>, %arg3: memref<8x4xbf16, #tpu.memory_space<vmem>>, %arg4: memref<8x4xbf16, #tpu.memory_space<vmem>>, %arg5: memref<8x4xbf16, #tpu.memory_space<vmem>>, %arg6: memref<8x4xbf16, #tpu.memory_space<vmem>>, %arg7: memref<8x4xbf16, #tpu.memory_space<vmem>>, %arg8: memref<8x4xbf16, #tpu.memory_space<vmem>>, %arg9: memref<8x4xbf16, #tpu.memory_space<vmem>>, %arg10: memref<9x4x128xbf16, #tpu.memory_space<vmem>>, %arg11: memref<1x128xf32, #tpu.memory_space<vmem>>, %arg12: memref<8x128xf32, #tpu.memory_space<vmem>>) attributes {dimension_semantics = [#tpu.dimension_semantics<parallel>], iteration_bounds = array<i64: 1>, scalar_prefetch = 0 : i64, scratch_operands = 0 : i64, tpu.core_type = #tpu.core_type<tc>, window_params = [{transform_indices = @transform_0, window_bounds = array<i64: 8, 4>}, {transform_indices = @transform_1, window_bounds = array<i64: 8, 4>}, {transform_indices = @transform_2, window_bounds = array<i64: 8, 4>}, {transform_indices = @transform_3, window_bounds = array<i64: 8, 4>}, {transform_indices = @transform_4, window_bounds = array<i64: 8, 4>}, {transform_indices = @transform_5, window_bounds = array<i64: 8, 4>}, {transform_indices = @transform_6, window_bounds = array<i64: 8, 4>}, {transform_indices = @transform_7, window_bounds = array<i64: 8, 4>}, {transform_indices = @transform_8, window_bounds = array<i64: 8, 4>}, {pipeline_mode = #tpu.pipeline_mode<synchronous>, transform_indices = @transform_9, window_bounds = array<i64: 9, 4, 128>}, {pipeline_mode = #tpu.pipeline_mode<synchronous>, transform_indices = @transform_10, window_bounds = array<i64: 1, 128>}, {transform_indices = @transform_11, window_bounds = array<i64: 8, 128>}]} {
    %c0 = arith.constant 0 : index
    %c0_0 = arith.constant 0 : index
    %0 = vector.load %arg1[%c0, %c0_0] : memref<8x4xbf16, #tpu.memory_space<vmem>>, vector<8x4xbf16>
    %c0_1 = arith.constant 0 : index
    %c0_2 = arith.constant 0 : index
    %c0_3 = arith.constant 0 : index
    %1 = vector.load %arg10[%c0_1, %c0_2, %c0_3] : memref<9x4x128xbf16, #tpu.memory_space<vmem>>, vector<1x4x128xbf16>
    %2 = vector.shape_cast %1 : vector<1x4x128xbf16> to vector<4x128xbf16>
    %cst = arith.constant dense<0.000000e+00> : vector<8x128xf32>
    %3 = tpu.matmul %0, %2, %cst {dimension_numbers = #tpu.dot_dimension_numbers<[1], [0], [0], [1], [0, 0, 1, 1], [], []>} : vector<8x4xbf16>, vector<4x128xbf16>, vector<8x128xf32> -> vector<8x128xf32>
    %c0_4 = arith.constant 0 : index
    %c0_5 = arith.constant 0 : index
    %4 = vector.load %arg11[%c0_4, %c0_5] : memref<1x128xf32, #tpu.memory_space<vmem>>, vector<1x128xf32>
    %5 = vector.broadcast %4 : vector<1x128xf32> to vector<8x128xf32>
    %6 = arith.addf %3, %5 : vector<8x128xf32>
    %c0_6 = arith.constant 0 : index
    %c0_7 = arith.constant 0 : index
    %7 = vector.load %arg2[%c0_6, %c0_7] : memref<8x4xbf16, #tpu.memory_space<vmem>>, vector<8x4xbf16>
    %c1 = arith.constant 1 : index
    %c0_8 = arith.constant 0 : index
    %c0_9 = arith.constant 0 : index
    %8 = vector.load %arg10[%c1, %c0_8, %c0_9] : memref<9x4x128xbf16, #tpu.memory_space<vmem>>, vector<1x4x128xbf16>
    %9 = vector.shape_cast %8 : vector<1x4x128xbf16> to vector<4x128xbf16>
    %cst_10 = arith.constant dense<0.000000e+00> : vector<8x128xf32>
    %10 = tpu.matmul %7, %9, %cst_10 {dimension_numbers = #tpu.dot_dimension_numbers<[1], [0], [0], [1], [0, 0, 1, 1], [], []>} : vector<8x4xbf16>, vector<4x128xbf16>, vector<8x128xf32> -> vector<8x128xf32>
    %11 = arith.addf %6, %10 : vector<8x128xf32>
    %c0_11 = arith.constant 0 : index
    %c0_12 = arith.constant 0 : index
    %12 = vector.load %arg3[%c0_11, %c0_12] : memref<8x4xbf16, #tpu.memory_space<vmem>>, vector<8x4xbf16>
    %c2 = arith.constant 2 : index
    %c0_13 = arith.constant 0 : index
    %c0_14 = arith.constant 0 : index
    %13 = vector.load %arg10[%c2, %c0_13, %c0_14] : memref<9x4x128xbf16, #tpu.memory_space<vmem>>, vector<1x4x128xbf16>
    %14 = vector.shape_cast %13 : vector<1x4x128xbf16> to vector<4x128xbf16>
    %cst_15 = arith.constant dense<0.000000e+00> : vector<8x128xf32>
    %15 = tpu.matmul %12, %14, %cst_15 {dimension_numbers = #tpu.dot_dimension_numbers<[1], [0], [0], [1], [0, 0, 1, 1], [], []>} : vector<8x4xbf16>, vector<4x128xbf16>, vector<8x128xf32> -> vector<8x128xf32>
    %16 = arith.addf %11, %15 : vector<8x128xf32>
    %c0_16 = arith.constant 0 : index
    %c0_17 = arith.constant 0 : index
    %17 = vector.load %arg4[%c0_16, %c0_17] : memref<8x4xbf16, #tpu.memory_space<vmem>>, vector<8x4xbf16>
    %c3 = arith.constant 3 : index
    %c0_18 = arith.constant 0 : index
    %c0_19 = arith.constant 0 : index
    %18 = vector.load %arg10[%c3, %c0_18, %c0_19] : memref<9x4x128xbf16, #tpu.memory_space<vmem>>, vector<1x4x128xbf16>
    %19 = vector.shape_cast %18 : vector<1x4x128xbf16> to vector<4x128xbf16>
    %cst_20 = arith.constant dense<0.000000e+00> : vector<8x128xf32>
    %20 = tpu.matmul %17, %19, %cst_20 {dimension_numbers = #tpu.dot_dimension_numbers<[1], [0], [0], [1], [0, 0, 1, 1], [], []>} : vector<8x4xbf16>, vector<4x128xbf16>, vector<8x128xf32> -> vector<8x128xf32>
    %21 = arith.addf %16, %20 : vector<8x128xf32>
    %c0_21 = arith.constant 0 : index
    %c0_22 = arith.constant 0 : index
    %22 = vector.load %arg5[%c0_21, %c0_22] : memref<8x4xbf16, #tpu.memory_space<vmem>>, vector<8x4xbf16>
    %c4 = arith.constant 4 : index
    %c0_23 = arith.constant 0 : index
    %c0_24 = arith.constant 0 : index
    %23 = vector.load %arg10[%c4, %c0_23, %c0_24] : memref<9x4x128xbf16, #tpu.memory_space<vmem>>, vector<1x4x128xbf16>
    %24 = vector.shape_cast %23 : vector<1x4x128xbf16> to vector<4x128xbf16>
    %cst_25 = arith.constant dense<0.000000e+00> : vector<8x128xf32>
    %25 = tpu.matmul %22, %24, %cst_25 {dimension_numbers = #tpu.dot_dimension_numbers<[1], [0], [0], [1], [0, 0, 1, 1], [], []>} : vector<8x4xbf16>, vector<4x128xbf16>, vector<8x128xf32> -> vector<8x128xf32>
    %26 = arith.addf %21, %25 : vector<8x128xf32>
    %c0_26 = arith.constant 0 : index
    %c0_27 = arith.constant 0 : index
    %27 = vector.load %arg6[%c0_26, %c0_27] : memref<8x4xbf16, #tpu.memory_space<vmem>>, vector<8x4xbf16>
    %c5 = arith.constant 5 : index
    %c0_28 = arith.constant 0 : index
    %c0_29 = arith.constant 0 : index
    %28 = vector.load %arg10[%c5, %c0_28, %c0_29] : memref<9x4x128xbf16, #tpu.memory_space<vmem>>, vector<1x4x128xbf16>
    %29 = vector.shape_cast %28 : vector<1x4x128xbf16> to vector<4x128xbf16>
    %cst_30 = arith.constant dense<0.000000e+00> : vector<8x128xf32>
    %30 = tpu.matmul %27, %29, %cst_30 {dimension_numbers = #tpu.dot_dimension_numbers<[1], [0], [0], [1], [0, 0, 1, 1], [], []>} : vector<8x4xbf16>, vector<4x128xbf16>, vector<8x128xf32> -> vector<8x128xf32>
    %31 = arith.addf %26, %30 : vector<8x128xf32>
    %c0_31 = arith.constant 0 : index
    %c0_32 = arith.constant 0 : index
    %32 = vector.load %arg7[%c0_31, %c0_32] : memref<8x4xbf16, #tpu.memory_space<vmem>>, vector<8x4xbf16>
    %c6 = arith.constant 6 : index
    %c0_33 = arith.constant 0 : index
    %c0_34 = arith.constant 0 : index
    %33 = vector.load %arg10[%c6, %c0_33, %c0_34] : memref<9x4x128xbf16, #tpu.memory_space<vmem>>, vector<1x4x128xbf16>
    %34 = vector.shape_cast %33 : vector<1x4x128xbf16> to vector<4x128xbf16>
    %cst_35 = arith.constant dense<0.000000e+00> : vector<8x128xf32>
    %35 = tpu.matmul %32, %34, %cst_35 {dimension_numbers = #tpu.dot_dimension_numbers<[1], [0], [0], [1], [0, 0, 1, 1], [], []>} : vector<8x4xbf16>, vector<4x128xbf16>, vector<8x128xf32> -> vector<8x128xf32>
    %36 = arith.addf %31, %35 : vector<8x128xf32>
    %c0_36 = arith.constant 0 : index
    %c0_37 = arith.constant 0 : index
    %37 = vector.load %arg8[%c0_36, %c0_37] : memref<8x4xbf16, #tpu.memory_space<vmem>>, vector<8x4xbf16>
    %c7 = arith.constant 7 : index
    %c0_38 = arith.constant 0 : index
    %c0_39 = arith.constant 0 : index
    %38 = vector.load %arg10[%c7, %c0_38, %c0_39] : memref<9x4x128xbf16, #tpu.memory_space<vmem>>, vector<1x4x128xbf16>
    %39 = vector.shape_cast %38 : vector<1x4x128xbf16> to vector<4x128xbf16>
    %cst_40 = arith.constant dense<0.000000e+00> : vector<8x128xf32>
    %40 = tpu.matmul %37, %39, %cst_40 {dimension_numbers = #tpu.dot_dimension_numbers<[1], [0], [0], [1], [0, 0, 1, 1], [], []>} : vector<8x4xbf16>, vector<4x128xbf16>, vector<8x128xf32> -> vector<8x128xf32>
    %41 = arith.addf %36, %40 : vector<8x128xf32>
    %c0_41 = arith.constant 0 : index
    %c0_42 = arith.constant 0 : index
    %42 = vector.load %arg9[%c0_41, %c0_42] : memref<8x4xbf16, #tpu.memory_space<vmem>>, vector<8x4xbf16>
    %c8 = arith.constant 8 : index
    %c0_43 = arith.constant 0 : index
    %c0_44 = arith.constant 0 : index
    %43 = vector.load %arg10[%c8, %c0_43, %c0_44] : memref<9x4x128xbf16, #tpu.memory_space<vmem>>, vector<1x4x128xbf16>
    %44 = vector.shape_cast %43 : vector<1x4x128xbf16> to vector<4x128xbf16>
    %cst_45 = arith.constant dense<0.000000e+00> : vector<8x128xf32>
    %45 = tpu.matmul %42, %44, %cst_45 {dimension_numbers = #tpu.dot_dimension_numbers<[1], [0], [0], [1], [0, 0, 1, 1], [], []>} : vector<8x4xbf16>, vector<4x128xbf16>, vector<8x128xf32> -> vector<8x128xf32>
    %46 = arith.addf %41, %45 : vector<8x128xf32>
    %cst_46 = arith.constant 0.000000e+00 : f32
    %47 = vector.broadcast %cst_46 : f32 to vector<8x128xf32>
    %48 = arith.maximumf %46, %47 : vector<8x128xf32>
    %c0_47 = arith.constant 0 : index
    %c0_48 = arith.constant 0 : index
    %49 = vector.load %arg12[%c0_47, %c0_48] : memref<8x128xf32, #tpu.memory_space<vmem>>, vector<8x128xf32>
    tpu.vector_store %arg12[%c0_47, %c0_48], %48 {strides = array<i32>} : memref<8x128xf32, #tpu.memory_space<vmem>>, vector<8x128xf32>,
    return
  }
  func.func @transform_0(%arg0: i32) -> (i32, i32) {
    %c0_i32 = arith.constant 0 : i32
    %c0_i32_0 = arith.constant 0 : i32
    return %arg0, %c0_i32 : i32, i32
  }
  func.func @transform_1(%arg0: i32) -> (i32, i32) {
    %c0_i32 = arith.constant 0 : i32
    %c0_i32_0 = arith.constant 0 : i32
    return %arg0, %c0_i32 : i32, i32
  }
  func.func @transform_2(%arg0: i32) -> (i32, i32) {
    %c0_i32 = arith.constant 0 : i32
    %c0_i32_0 = arith.constant 0 : i32
    return %arg0, %c0_i32 : i32, i32
  }
  func.func @transform_3(%arg0: i32) -> (i32, i32) {
    %c0_i32 = arith.constant 0 : i32
    %c0_i32_0 = arith.constant 0 : i32
    return %arg0, %c0_i32 : i32, i32
  }
  func.func @transform_4(%arg0: i32) -> (i32, i32) {
    %c0_i32 = arith.constant 0 : i32
    %c0_i32_0 = arith.constant 0 : i32
    return %arg0, %c0_i32 : i32, i32
  }
  func.func @transform_5(%arg0: i32) -> (i32, i32) {
    %c0_i32 = arith.constant 0 : i32
    %c0_i32_0 = arith.constant 0 : i32
    return %arg0, %c0_i32 : i32, i32
  }
  func.func @transform_6(%arg0: i32) -> (i32, i32) {
    %c0_i32 = arith.constant 0 : i32
    %c0_i32_0 = arith.constant 0 : i32
    return %arg0, %c0_i32 : i32, i32
  }
  func.func @transform_7(%arg0: i32) -> (i32, i32) {
    %c0_i32 = arith.constant 0 : i32
    %c0_i32_0 = arith.constant 0 : i32
    return %arg0, %c0_i32 : i32, i32
  }
  func.func @transform_8(%arg0: i32) -> (i32, i32) {
    %c0_i32 = arith.constant 0 : i32
    %c0_i32_0 = arith.constant 0 : i32
    return %arg0, %c0_i32 : i32, i32
  }
  func.func @transform_9(%arg0: i32) -> (i32, i32, i32) {
    %c0_i32 = arith.constant 0 : i32
    %c0_i32_0 = arith.constant 0 : i32
    %c0_i32_1 = arith.constant 0 : i32
    %c0_i32_2 = arith.constant 0 : i32
    return %c0_i32, %c0_i32_0, %c0_i32_1 : i32, i32, i32
  }
  func.func @transform_10(%arg0: i32) -> (i32, i32) {
    %c0_i32 = arith.constant 0 : i32
    %c0_i32_0 = arith.constant 0 : i32
    %c0_i32_1 = arith.constant 0 : i32
    return %c0_i32, %c0_i32_0 : i32, i32
  }
  func.func @transform_11(%arg0: i32) -> (i32, i32) {
    %c0_i32 = arith.constant 0 : i32
    %c0_i32_0 = arith.constant 0 : i32
    return %arg0, %c0_i32 : i32, i32
  }
}

module attributes {stable_mosaic.version = 11 : i64} {
  func.func @_gap_fc_kernel(%arg0: memref<2x4x32xf32, #tpu.memory_space<vmem>>, %arg1: memref<32x128xf32, #tpu.memory_space<vmem>>, %arg2: memref<1x128xf32, #tpu.memory_space<vmem>>, %arg3: memref<2x128xf32, #tpu.memory_space<vmem>>) attributes {dimension_semantics = [], scalar_prefetch = 0 : i64, scratch_operands = 0 : i64, tpu.core_type = #tpu.core_type<tc>} {
    %c0 = arith.constant 0 : index
    %c0_0 = arith.constant 0 : index
    %c0_1 = arith.constant 0 : index
    %0 = vector.load %arg0[%c0, %c0_0, %c0_1] : memref<2x4x32xf32, #tpu.memory_space<vmem>>, vector<2x4x32xf32>
    %cst = arith.constant dense<0.000000e+00> : vector<2x32xf32>
    %1 = vector.multi_reduction <add>, %0, %cst [1] : vector<2x4x32xf32> to vector<2x32xf32>
    %cst_2 = arith.constant 4.000000e+00 : f32
    %2 = vector.broadcast %cst_2 : f32 to vector<2x32xf32>
    %3 = arith.divf %1, %2 : vector<2x32xf32>
    %c0_3 = arith.constant 0 : index
    %c0_4 = arith.constant 0 : index
    %4 = vector.load %arg1[%c0_3, %c0_4] : memref<32x128xf32, #tpu.memory_space<vmem>>, vector<32x128xf32>
    %cst_5 = arith.constant dense<0.000000e+00> : vector<2x128xf32>
    %5 = tpu.matmul %3, %4, %cst_5 {dimension_numbers = #tpu.dot_dimension_numbers<[1], [0], [0], [1], [0, 0, 1, 1], [], []>} : vector<2x32xf32>, vector<32x128xf32>, vector<2x128xf32> -> vector<2x128xf32>
    %c0_6 = arith.constant 0 : index
    %c0_7 = arith.constant 0 : index
    %6 = vector.load %arg2[%c0_6, %c0_7] : memref<1x128xf32, #tpu.memory_space<vmem>>, vector<1x128xf32>
    %7 = vector.broadcast %6 : vector<1x128xf32> to vector<2x128xf32>
    %8 = arith.addf %5, %7 : vector<2x128xf32>
    %c0_8 = arith.constant 0 : index
    %c0_9 = arith.constant 0 : index
    %9 = vector.load %arg3[%c0_8, %c0_9] : memref<2x128xf32, #tpu.memory_space<vmem>>, vector<2x128xf32>
    tpu.vector_store %arg3[%c0_8, %c0_9], %8 {strides = array<i32>} : memref<2x128xf32, #tpu.memory_space<vmem>>, vector<2x128xf32>,
    return
  }
}

</mosaic_0001>

<llo_original>
// kernel: vonet_forward.5
$region0: #{vonet_forward.5}
  #allocation0 [shape = 'u32[]', space=smem, size = 0x4, offset = 0x4, fixed_abs, tag = 'smem constant byte address 0x4 - core index']
  #allocation1 [shape = 'u32[72,128]{1,0:T(1,128)}', space=vmem, size = 0x9000, scoped, tag = 'internal scratch']
  %s0 = inlined_call_operand.vmem [shape: bf16[32,16], index: 0, kind: input, shape index: {}]
  %s1 = inlined_call_operand.vmem [shape: bf16[32,16], index: 1, kind: input, shape index: {}]
  %s2 = inlined_call_operand.vmem [shape: bf16[32,16], index: 2, kind: input, shape index: {}]
  %s3 = inlined_call_operand.vmem [shape: bf16[32,16], index: 3, kind: input, shape index: {}]
  %s4 = inlined_call_operand.vmem [shape: bf16[32,16], index: 4, kind: input, shape index: {}]
  %s5 = inlined_call_operand.vmem [shape: bf16[32,16], index: 5, kind: input, shape index: {}]
  %s6 = inlined_call_operand.vmem [shape: bf16[32,16], index: 6, kind: input, shape index: {}]
  %s7 = inlined_call_operand.vmem [shape: bf16[32,16], index: 7, kind: input, shape index: {}]
  %s8 = inlined_call_operand.vmem [shape: bf16[32,16], index: 8, kind: input, shape index: {}]
  %s9 = inlined_call_operand.vmem [shape: bf16[9,16,128], index: 9, kind: input, shape index: {}]
  %s10 = inlined_call_operand.vmem [shape: f32[1,128], index: 10, kind: input, shape index: {}]
  %s11 = inlined_call_operand.vmem [shape: f32[32,128], index: 11, kind: output, shape index: {}]
  %s12 = sld [smem:[#allocation0]]
  $region54: #{vonet_forward.5} parent=0
    _
  %s14 = ssub.s32 1, %s12
  %s15 = scalar_select 0, %s14, %s12
  // Predicated region
  $region2: #{vonet_forward.5} parent=0 // pred_check
    _
  $region3: #{vonet_forward.5} parent=0 // pred_check_branch
    %17 = sbr.rel (0) target = $region5
  $region4: #{vonet_forward.5} parent=0 // pred_region
    _
  $region5: #{vonet_forward.5} parent=0 // pred_fallthru
    _
  // Predicated region
  $region6: #{vonet_forward.5} parent=0 // pred_check
    _
  $region7: #{vonet_forward.5} parent=0 // pred_check_branch
    %19 = sbr.rel (0) target = $region9
  $region8: #{vonet_forward.5} parent=0 // pred_region
    _
  $region9: #{vonet_forward.5} parent=0 // pred_fallthru
    _
  // Predicated region
  $region10: #{vonet_forward.5} parent=0 // pred_check
    _
  $region11: #{vonet_forward.5} parent=0 // pred_check_branch
    %21 = sbr.rel (0) target = $region13
  $region12: #{vonet_forward.5} parent=0 // pred_region
    _
  $region13: #{vonet_forward.5} parent=0 // pred_fallthru
    _
  // Predicated region
  $region14: #{vonet_forward.5} parent=0 // pred_check
    _
  $region15: #{vonet_forward.5} parent=0 // pred_check_branch
    %23 = sbr.rel (0) target = $region17
  $region16: #{vonet_forward.5} parent=0 // pred_region
    _
  $region17: #{vonet_forward.5} parent=0 // pred_fallthru
    _
  // Predicated region
  $region18: #{vonet_forward.5} parent=0 // pred_check
    _
  $region19: #{vonet_forward.5} parent=0 // pred_check_branch
    %25 = sbr.rel (0) target = $region21
  $region20: #{vonet_forward.5} parent=0 // pred_region
    _
  $region21: #{vonet_forward.5} parent=0 // pred_fallthru
    _
  // Predicated region
  $region22: #{vonet_forward.5} parent=0 // pred_check
    _
  $region23: #{vonet_forward.5} parent=0 // pred_check_branch
    %27 = sbr.rel (0) target = $region25
  $region24: #{vonet_forward.5} parent=0 // pred_region
    _
  $region25: #{vonet_forward.5} parent=0 // pred_fallthru
    _
  // Predicated region
  $region26: #{vonet_forward.5} parent=0 // pred_check
    _
  $region27: #{vonet_forward.5} parent=0 // pred_check_branch
    %29 = sbr.rel (0) target = $region29
  $region28: #{vonet_forward.5} parent=0 // pred_region
    _
  $region29: #{vonet_forward.5} parent=0 // pred_fallthru
    _
  // Predicated region
  $region30: #{vonet_forward.5} parent=0 // pred_check
    _
  $region31: #{vonet_forward.5} parent=0 // pred_check_branch
    %31 = sbr.rel (0) target = $region33
  $region32: #{vonet_forward.5} parent=0 // pred_region
    _
  $region33: #{vonet_forward.5} parent=0 // pred_fallthru
    _
  // Predicated region
  $region34: #{vonet_forward.5} parent=0 // pred_check
    _
  $region35: #{vonet_forward.5} parent=0 // pred_check_branch
    %33 = sbr.rel (0) target = $region37
  $region36: #{vonet_forward.5} parent=0 // pred_region
    _
  $region37: #{vonet_forward.5} parent=0 // pred_fallthru
    _
  // Predicated region
  $region38: #{vonet_forward.5} parent=0 // pred_check
    _
  $region39: #{vonet_forward.5} parent=0 // pred_check_branch
    %35 = sbr.rel (0) target = $region41
  $region40: #{vonet_forward.5} parent=0 // pred_region
    _
  $region41: #{vonet_forward.5} parent=0 // pred_fallthru
    _
  // Predicated region
  $region42: #{vonet_forward.5} parent=0 // pred_check
    _
  $region43: #{vonet_forward.5} parent=0 // pred_check_branch
    %37 = sbr.rel (0) target = $region45
  $region44: #{vonet_forward.5} parent=0 // pred_region
    _
  $region45: #{vonet_forward.5} parent=0 // pred_fallthru
    _
  %v39 = vld [vmem:[%s0] sm:$0xf]
  %v40 = vld [vmem:[%s0 + $0x4] sm:$0xf]
  %v41 = vld [vmem:[%s0 + $0x8] sm:$0xf]
  %v42 = vld [vmem:[%s0 + $0xc] sm:$0xf]
  %v43 = vld [vmem:[%s9] sm:$0xf]
  %v44 = vld [vmem:[%s9 + $0x4] sm:$0xf]
  %v45 = vld [vmem:[%s10] sm:$0x1]
  %v47 = vperm.slane %v45, 0
  %v53 = vunpack.c.l.b16 %v39
  %v54 = vunpack.c.l.b16 %v40
  %v55 = vunpack.c.l.b16 %v41
  %v56 = vunpack.c.l.b16 %v42
  %v57 = vpack.c.b16 %v54, %v53
  %v58 = vpack.c.b16 %v56, %v55
  %v61 = vunpack.c.l.b16 %v43
  %v62 = vunpack.c.l.b16 %v44
  %v63 = vpack.c.b16 %v62, %v61
  %vm65 = vcmask 130048
  %v67 = vsel %vm65, %v57, 0
  %v70 = vsel %vm65, %v58, 0
  %72 = vmatpush.bf16.msra.mxu0 0
  %73 = vmatpush.bf16.msra.mxu0 0
  %74 = vmatpush.bf16.msra.mxu0 0
  %75 = vmatpush.bf16.msra.mxu0 0
  %76 = vmatpush.bf16.msra.mxu0 0
  %77 = vmatpush.bf16.msra.mxu0 0
  %78 = vmatpush.bf16.msra.mxu0 0
  %79 = vmatpush.bf16.msra.mxu0 %v63
  %80 = vmatmul.bf16.gmra.mxu0 %v67
  %v81 = vpop.f32.mrf.mxu0
  %v82 = vadd.f32 %v47, %v81
  %v83 = vpop.f32.mrf.mxu0
  %v84 = vadd.f32 %v47, %v83
  %85 = vmatmul.bf16.gmra.mxu0 %v70
  %v86 = vpop.f32.mrf.mxu0
  %v87 = vadd.f32 %v47, %v86
  %v88 = vpop.f32.mrf.mxu0
  %v89 = vadd.f32 %v47, %v88
  %90 = vdwg.mxu0
  %v91 = vld [vmem:[%s1] sm:$0xf]
  %v92 = vld [vmem:[%s1 + $0x4] sm:$0xf]
  %v93 = vld [vmem:[%s1 + $0x8] sm:$0xf]
  %v94 = vld [vmem:[%s1 + $0xc] sm:$0xf]
  %s95 = scalar_lea.vmem %s9, 8
  %v96 = vld [vmem:[%s95] sm:$0xf]
  %v97 = vld [vmem:[%s95 + $0x4] sm:$0xf]
  %v102 = vunpack.c.l.b16 %v91
  %v103 = vunpack.c.l.b16 %v92
  %v104 = vunpack.c.l.b16 %v93
  %v105 = vunpack.c.l.b16 %v94
  %v106 = vpack.c.b16 %v103, %v102
  %v107 = vpack.c.b16 %v105, %v104
  %v110 = vunpack.c.l.b16 %v96
  %v111 = vunpack.c.l.b16 %v97
  %v112 = vpack.c.b16 %v111, %v110
  %v115 = vsel %vm65, %v106, 0
  %v118 = vsel %vm65, %v107, 0
  %120 = vmatpush.bf16.msra.mxu0 0
  %121 = vmatpush.bf16.msra.mxu0 0
  %122 = vmatpush.bf16.msra.mxu0 0
  %123 = vmatpush.bf16.msra.mxu0 0
  %124 = vmatpush.bf16.msra.mxu0 0
  %125 = vmatpush.bf16.msra.mxu0 0
  %126 = vmatpush.bf16.msra.mxu0 0
  %127 = vmatpush.bf16.msra.mxu0 %v112
  %128 = vmatmul.bf16.gmra.mxu0 %v115
  %v129 = vpop.f32.mrf.mxu0
  %v130 = vadd.f32 0.0, %v129
  %v131 = vpop.f32.mrf.mxu0
  %v132 = vadd.f32 0.0, %v131
  %133 = vmatmul.bf16.gmra.mxu0 %v118
  %v134 = vpop.f32.mrf.mxu0
  %v135 = vadd.f32 0.0, %v134
  %v136 = vpop.f32.mrf.mxu0
  %v137 = vadd.f32 0.0, %v136
  %138 = vdwg.mxu0
  %v139 = vadd.f32 %v82, %v130
  %v140 = vadd.f32 %v84, %v132
  %v141 = vadd.f32 %v87, %v135
  %v142 = vadd.f32 %v89, %v137
  %v143 = vld [vmem:[%s2] sm:$0xf]
  %v144 = vld [vmem:[%s2 + $0x4] sm:$0xf]
  %v145 = vld [vmem:[%s2 + $0x8] sm:$0xf]
  %v146 = vld [vmem:[%s2 + $0xc] sm:$0xf]
  %s147 = scalar_lea.vmem %s9, 16
  %v148 = vld [vmem:[%s147] sm:$0xf]
  %v149 = vld [vmem:[%s147 + $0x4] sm:$0xf]
  %v154 = vunpack.c.l.b16 %v143
  %v155 = vunpack.c.l.b16 %v144
  %v156 = vunpack.c.l.b16 %v145
  %v157 = vunpack.c.l.b16 %v146
  %v158 = vpack.c.b16 %v155, %v154
  %v159 = vpack.c.b16 %v157, %v156
  %v162 = vunpack.c.l.b16 %v148
  %v163 = vunpack.c.l.b16 %v149
  %v164 = vpack.c.b16 %v163, %v162
  %v167 = vsel %vm65, %v158, 0
  %v170 = vsel %vm65, %v159, 0
  %172 = vmatpush.bf16.msra.mxu0 0
  %173 = vmatpush.bf16.msra.mxu0 0
  %174 = vmatpush.bf16.msra.mxu0 0
  %175 = vmatpush.bf16.msra.mxu0 0
  %176 = vmatpush.bf16.msra.mxu0 0
  %177 = vmatpush.bf16.msra.mxu0 0
  %178 = vmatpush.bf16.msra.mxu0 0
  %179 = vmatpush.bf16.msra.mxu0 %v164
  %180 = vmatmul.bf16.gmra.mxu0 %v167
  %v181 = vpop.f32.mrf.mxu0
  %v182 = vadd.f32 0.0, %v181
  %v183 = vpop.f32.mrf.mxu0
  %v184 = vadd.f32 0.0, %v183
  %185 = vmatmul.bf16.gmra.mxu0 %v170
  %v186 = vpop.f32.mrf.mxu0
  %v187 = vadd.f32 0.0, %v186
  %v188 = vpop.f32.mrf.mxu0
  %v189 = vadd.f32 0.0, %v188
  %190 = vdwg.mxu0
  %v191 = vadd.f32 %v139, %v182
  %v192 = vadd.f32 %v140, %v184
  %v193 = vadd.f32 %v141, %v187
  %v194 = vadd.f32 %v142, %v189
  %v195 = vld [vmem:[%s3] sm:$0xf]
  %v196 = vld [vmem:[%s3 + $0x4] sm:$0xf]
  %v197 = vld [vmem:[%s3 + $0x8] sm:$0xf]
  %v198 = vld [vmem:[%s3 + $0xc] sm:$0xf]
  %s199 = scalar_lea.vmem %s9, 24
  %v200 = vld [vmem:[%s199] sm:$0xf]
  %v201 = vld [vmem:[%s199 + $0x4] sm:$0xf]
  %v206 = vunpack.c.l.b16 %v195
  %v207 = vunpack.c.l.b16 %v196
  %v208 = vunpack.c.l.b16 %v197
  %v209 = vunpack.c.l.b16 %v198
  %v210 = vpack.c.b16 %v207, %v206
  %v211 = vpack.c.b16 %v209, %v208
  %v214 = vunpack.c.l.b16 %v200
  %v215 = vunpack.c.l.b16 %v201
  %v216 = vpack.c.b16 %v215, %v214
  %v219 = vsel %vm65, %v210, 0
  %v222 = vsel %vm65, %v211, 0
  %224 = vmatpush.bf16.msra.mxu0 0
  %225 = vmatpush.bf16.msra.mxu0 0
  %226 = vmatpush.bf16.msra.mxu0 0
  %227 = vmatpush.bf16.msra.mxu0 0
  %228 = vmatpush.bf16.msra.mxu0 0
  %229 = vmatpush.bf16.msra.mxu0 0
  %230 = vmatpush.bf16.msra.mxu0 0
  %231 = vmatpush.bf16.msra.mxu0 %v216
  %232 = vmatmul.bf16.gmra.mxu0 %v219
  %v233 = vpop.f32.mrf.mxu0
  %v234 = vadd.f32 0.0, %v233
  %v235 = vpop.f32.mrf.mxu0
  %v236 = vadd.f32 0.0, %v235
  %237 = vmatmul.bf16.gmra.mxu0 %v222
  %v238 = vpop.f32.mrf.mxu0
  %v239 = vadd.f32 0.0, %v238
  %v240 = vpop.f32.mrf.mxu0
  %v241 = vadd.f32 0.0, %v240
  %242 = vdwg.mxu0
  %v243 = vadd.f32 %v191, %v234
  %v244 = vadd.f32 %v192, %v236
  %v245 = vadd.f32 %v193, %v239
  %v246 = vadd.f32 %v194, %v241
  %v247 = vld [vmem:[%s4] sm:$0xf]
  %v248 = vld [vmem:[%s4 + $0x4] sm:$0xf]
  %v249 = vld [vmem:[%s4 + $0x8] sm:$0xf]
  %v250 = vld [vmem:[%s4 + $0xc] sm:$0xf]
  %s251 = scalar_lea.vmem %s9, 32
  %v252 = vld [vmem:[%s251] sm:$0xf]
  %v253 = vld [vmem:[%s251 + $0x4] sm:$0xf]
  %v258 = vunpack.c.l.b16 %v247
  %v259 = vunpack.c.l.b16 %v248
  %v260 = vunpack.c.l.b16 %v249
  %v261 = vunpack.c.l.b16 %v250
  %v262 = vpack.c.b16 %v259, %v258
  %v263 = vpack.c.b16 %v261, %v260
  %v266 = vunpack.c.l.b16 %v252
  %v267 = vunpack.c.l.b16 %v253
  %v268 = vpack.c.b16 %v267, %v266
  %v271 = vsel %vm65, %v262, 0
  %v274 = vsel %vm65, %v263, 0
  %276 = vmatpush.bf16.msra.mxu0 0
  %277 = vmatpush.bf16.msra.mxu0 0
  %278 = vmatpush.bf16.msra.mxu0 0
  %279 = vmatpush.bf16.msra.mxu0 0
  %280 = vmatpush.bf16.msra.mxu0 0
  %281 = vmatpush.bf16.msra.mxu0 0
  %282 = vmatpush.bf16.msra.mxu0 0
  %283 = vmatpush.bf16.msra.mxu0 %v268
  %284 = vmatmul.bf16.gmra.mxu0 %v271
  %v285 = vpop.f32.mrf.mxu0
  %v286 = vadd.f32 0.0, %v285
  %v287 = vpop.f32.mrf.mxu0
  %v288 = vadd.f32 0.0, %v287
  %289 = vmatmul.bf16.gmra.mxu0 %v274
  %v290 = vpop.f32.mrf.mxu0
  %v291 = vadd.f32 0.0, %v290
  %v292 = vpop.f32.mrf.mxu0
  %v293 = vadd.f32 0.0, %v292
  %294 = vdwg.mxu0
  %v295 = vadd.f32 %v243, %v286
  %v296 = vadd.f32 %v244, %v288
  %v297 = vadd.f32 %v245, %v291
  %v298 = vadd.f32 %v246, %v293
  %v299 = vld [vmem:[%s5] sm:$0xf]
  %v300 = vld [vmem:[%s5 + $0x4] sm:$0xf]
  %v301 = vld [vmem:[%s5 + $0x8] sm:$0xf]
  %v302 = vld [vmem:[%s5 + $0xc] sm:$0xf]
  %s303 = scalar_lea.vmem %s9, 40
  %v304 = vld [vmem:[%s303] sm:$0xf]
  %v305 = vld [vmem:[%s303 + $0x4] sm:$0xf]
  %v310 = vunpack.c.l.b16 %v299
  %v311 = vunpack.c.l.b16 %v300
  %v312 = vunpack.c.l.b16 %v301
  %v313 = vunpack.c.l.b16 %v302
  %v314 = vpack.c.b16 %v311, %v310
  %v315 = vpack.c.b16 %v313, %v312
  %v318 = vunpack.c.l.b16 %v304
  %v319 = vunpack.c.l.b16 %v305
  %v320 = vpack.c.b16 %v319, %v318
  %v323 = vsel %vm65, %v314, 0
  %v326 = vsel %vm65, %v315, 0
  %328 = vmatpush.bf16.msra.mxu0 0
  %329 = vmatpush.bf16.msra.mxu0 0
  %330 = vmatpush.bf16.msra.mxu0 0
  %331 = vmatpush.bf16.msra.mxu0 0
  %332 = vmatpush.bf16.msra.mxu0 0
  %333 = vmatpush.bf16.msra.mxu0 0
  %334 = vmatpush.bf16.msra.mxu0 0
  %335 = vmatpush.bf16.msra.mxu0 %v320
  %336 = vmatmul.bf16.gmra.mxu0 %v323
  %v337 = vpop.f32.mrf.mxu0
  %v338 = vadd.f32 0.0, %v337
  %v339 = vpop.f32.mrf.mxu0
  %v340 = vadd.f32 0.0, %v339
  %341 = vmatmul.bf16.gmra.mxu0 %v326
  %v342 = vpop.f32.mrf.mxu0
  %v343 = vadd.f32 0.0, %v342
  %v344 = vpop.f32.mrf.mxu0
  %v345 = vadd.f32 0.0, %v344
  %346 = vdwg.mxu0
  %v347 = vadd.f32 %v295, %v338
  %v348 = vadd.f32 %v296, %v340
  %v349 = vadd.f32 %v297, %v343
  %v350 = vadd.f32 %v298, %v345
  %v351 = vld [vmem:[%s6] sm:$0xf]
  %v352 = vld [vmem:[%s6 + $0x4] sm:$0xf]
  %v353 = vld [vmem:[%s6 + $0x8] sm:$0xf]
  %v354 = vld [vmem:[%s6 + $0xc] sm:$0xf]
  %s355 = scalar_lea.vmem %s9, 48
  %v356 = vld [vmem:[%s355] sm:$0xf]
  %v357 = vld [vmem:[%s355 + $0x4] sm:$0xf]
  %v362 = vunpack.c.l.b16 %v351
  %v363 = vunpack.c.l.b16 %v352
  %v364 = vunpack.c.l.b16 %v353
  %v365 = vunpack.c.l.b16 %v354
  %v366 = vpack.c.b16 %v363, %v362
  %v367 = vpack.c.b16 %v365, %v364
  %v370 = vunpack.c.l.b16 %v356
  %v371 = vunpack.c.l.b16 %v357
  %v372 = vpack.c.b16 %v371, %v370
  %v375 = vsel %vm65, %v366, 0
  %v378 = vsel %vm65, %v367, 0
  %380 = vmatpush.bf16.msra.mxu0 0
  %381 = vmatpush.bf16.msra.mxu0 0
  %382 = vmatpush.bf16.msra.mxu0 0
  %383 = vmatpush.bf16.msra.mxu0 0
  %384 = vmatpush.bf16.msra.mxu0 0
  %385 = vmatpush.bf16.msra.mxu0 0
  %386 = vmatpush.bf16.msra.mxu0 0
  %387 = vmatpush.bf16.msra.mxu0 %v372
  %388 = vmatmul.bf16.gmra.mxu0 %v375
  %v389 = vpop.f32.mrf.mxu0
  %v390 = vadd.f32 0.0, %v389
  %v391 = vpop.f32.mrf.mxu0
  %v392 = vadd.f32 0.0, %v391
  %393 = vmatmul.bf16.gmra.mxu0 %v378
  %v394 = vpop.f32.mrf.mxu0
  %v395 = vadd.f32 0.0, %v394
  %v396 = vpop.f32.mrf.mxu0
  %v397 = vadd.f32 0.0, %v396
  %398 = vdwg.mxu0
  %v399 = vadd.f32 %v347, %v390
  %v400 = vadd.f32 %v348, %v392
  %v401 = vadd.f32 %v349, %v395
  %v402 = vadd.f32 %v350, %v397
  %v403 = vld [vmem:[%s7] sm:$0xf]
  %v404 = vld [vmem:[%s7 + $0x4] sm:$0xf]
  %v405 = vld [vmem:[%s7 + $0x8] sm:$0xf]
  %v406 = vld [vmem:[%s7 + $0xc] sm:$0xf]
  %s407 = scalar_lea.vmem %s9, 56
  %v408 = vld [vmem:[%s407] sm:$0xf]
  %v409 = vld [vmem:[%s407 + $0x4] sm:$0xf]
  %v414 = vunpack.c.l.b16 %v403
  %v415 = vunpack.c.l.b16 %v404
  %v416 = vunpack.c.l.b16 %v405
  %v417 = vunpack.c.l.b16 %v406
  %v418 = vpack.c.b16 %v415, %v414
  %v419 = vpack.c.b16 %v417, %v416
  %v422 = vunpack.c.l.b16 %v408
  %v423 = vunpack.c.l.b16 %v409
  %v424 = vpack.c.b16 %v423, %v422
  %v427 = vsel %vm65, %v418, 0
  %v430 = vsel %vm65, %v419, 0
  %432 = vmatpush.bf16.msra.mxu0 0
  %433 = vmatpush.bf16.msra.mxu0 0
  %434 = vmatpush.bf16.msra.mxu0 0
  %435 = vmatpush.bf16.msra.mxu0 0
  %436 = vmatpush.bf16.msra.mxu0 0
  %437 = vmatpush.bf16.msra.mxu0 0
  %438 = vmatpush.bf16.msra.mxu0 0
  %439 = vmatpush.bf16.msra.mxu0 %v424
  %440 = vmatmul.bf16.gmra.mxu0 %v427
  %v441 = vpop.f32.mrf.mxu0
  %v442 = vadd.f32 0.0, %v441
  %v443 = vpop.f32.mrf.mxu0
  %v444 = vadd.f32 0.0, %v443
  %445 = vmatmul.bf16.gmra.mxu0 %v430
  %v446 = vpop.f32.mrf.mxu0
  %v447 = vadd.f32 0.0, %v446
  %v448 = vpop.f32.mrf.mxu0
  %v449 = vadd.f32 0.0, %v448
  %450 = vdwg.mxu0
  %v451 = vadd.f32 %v399, %v442
  %v452 = vadd.f32 %v400, %v444
  %v453 = vadd.f32 %v401, %v447
  %v454 = vadd.f32 %v402, %v449
  %v455 = vld [vmem:[%s8] sm:$0xf]
  %v456 = vld [vmem:[%s8 + $0x4] sm:$0xf]
  %v457 = vld [vmem:[%s8 + $0x8] sm:$0xf]
  %v458 = vld [vmem:[%s8 + $0xc] sm:$0xf]
  %s459 = scalar_lea.vmem %s9, 64
  %v460 = vld [vmem:[%s459] sm:$0xf]
  %v461 = vld [vmem:[%s459 + $0x4] sm:$0xf]
  %v466 = vunpack.c.l.b16 %v455
  %v467 = vunpack.c.l.b16 %v456
  %v468 = vunpack.c.l.b16 %v457
  %v469 = vunpack.c.l.b16 %v458
  %v470 = vpack.c.b16 %v467, %v466
  %v471 = vpack.c.b16 %v469, %v468
  %v474 = vunpack.c.l.b16 %v460
  %v475 = vunpack.c.l.b16 %v461
  %v476 = vpack.c.b16 %v475, %v474
  %v479 = vsel %vm65, %v470, 0
  %v482 = vsel %vm65, %v471, 0
  %484 = vmatpush.bf16.msra.mxu0 0
  %485 = vmatpush.bf16.msra.mxu0 0
  %486 = vmatpush.bf16.msra.mxu0 0
  %487 = vmatpush.bf16.msra.mxu0 0
  %488 = vmatpush.bf16.msra.mxu0 0
  %489 = vmatpush.bf16.msra.mxu0 0
  %490 = vmatpush.bf16.msra.mxu0 0
  %491 = vmatpush.bf16.msra.mxu0 %v476
  %492 = vmatmul.bf16.gmra.mxu0 %v479
  %v493 = vpop.f32.mrf.mxu0
  %v494 = vadd.f32 0.0, %v493
  %v495 = vpop.f32.mrf.mxu0
  %v496 = vadd.f32 0.0, %v495
  %497 = vmatmul.bf16.gmra.mxu0 %v482
  %v498 = vpop.f32.mrf.mxu0
  %v499 = vadd.f32 0.0, %v498
  %v500 = vpop.f32.mrf.mxu0
  %v501 = vadd.f32 0.0, %v500
  %502 = vdwg.mxu0
  %v503 = vadd.f32 %v451, %v494
  %v504 = vadd.f32 %v452, %v496
  %v505 = vadd.f32 %v453, %v499
  %v506 = vadd.f32 %v454, %v501
  %507 = vst [vmem:[%s11] sm:$0xff] %v503
  %508 = vst [vmem:[%s11 + $0x8] sm:$0xff] %v504
  %509 = vst [vmem:[%s11 + $0x10] sm:$0xff] %v505
  %510 = vst [vmem:[%s11 + $0x18] sm:$0xff] %v506
  // Predicated region
  $region46: #{vonet_forward.5} parent=0 // pred_check
    _
  $region47: #{vonet_forward.5} parent=0 // pred_check_branch
    %512 = sbr.rel (0) target = $region49
  $region48: #{vonet_forward.5} parent=0 // pred_region
    _
  $region49: #{vonet_forward.5} parent=0 // pred_fallthru
    _
  // Predicated region
  $region50: #{vonet_forward.5} parent=0 // pred_check
    _
  $region51: #{vonet_forward.5} parent=0 // pred_check_branch
    %514 = sbr.rel (0) target = $region53
  $region52: #{vonet_forward.5} parent=0 // pred_region
    _
  $region53: #{vonet_forward.5} parent=0 // pred_fallthru
    _

// kernel: vonet_forward.4
$region0: #{vonet_forward.4}
  #allocation0 [shape = 'u32[]', space=smem, size = 0x4, offset = 0x4, fixed_abs, tag = 'smem constant byte address 0x4 - core index']
  #allocation1 [shape = 'u32[72,128]{1,0:T(1,128)}', space=vmem, size = 0x9000, scoped, tag = 'internal scratch']
  %s0 = inlined_call_operand.vmem [shape: bf16[128,6], index: 0, kind: input, shape index: {}]
  %s1 = inlined_call_operand.vmem [shape: bf16[128,6], index: 1, kind: input, shape index: {}]
  %s2 = inlined_call_operand.vmem [shape: bf16[128,6], index: 2, kind: input, shape index: {}]
  %s3 = inlined_call_operand.vmem [shape: bf16[128,6], index: 3, kind: input, shape index: {}]
  %s4 = inlined_call_operand.vmem [shape: bf16[128,6], index: 4, kind: input, shape index: {}]
  %s5 = inlined_call_operand.vmem [shape: bf16[128,6], index: 5, kind: input, shape index: {}]
  %s6 = inlined_call_operand.vmem [shape: bf16[128,6], index: 6, kind: input, shape index: {}]
  %s7 = inlined_call_operand.vmem [shape: bf16[128,6], index: 7, kind: input, shape index: {}]
  %s8 = inlined_call_operand.vmem [shape: bf16[128,6], index: 8, kind: input, shape index: {}]
  %s9 = inlined_call_operand.vmem [shape: bf16[9,6,128], index: 9, kind: input, shape index: {}]
  %s10 = inlined_call_operand.vmem [shape: f32[1,128], index: 10, kind: input, shape index: {}]
  %s11 = inlined_call_operand.vmem [shape: f32[128,128], index: 11, kind: output, shape index: {}]
  %s12 = sld [smem:[#allocation0]]
  $region54: #{vonet_forward.4} parent=0
    _
  %s14 = ssub.s32 1, %s12
  %s15 = scalar_select 0, %s14, %s12
  // Predicated region
  $region2: #{vonet_forward.4} parent=0 // pred_check
    _
  $region3: #{vonet_forward.4} parent=0 // pred_check_branch
    %17 = sbr.rel (0) target = $region5
  $region4: #{vonet_forward.4} parent=0 // pred_region
    _
  $region5: #{vonet_forward.4} parent=0 // pred_fallthru
    _
  // Predicated region
  $region6: #{vonet_forward.4} parent=0 // pred_check
    _
  $region7: #{vonet_forward.4} parent=0 // pred_check_branch
    %19 = sbr.rel (0) target = $region9
  $region8: #{vonet_forward.4} parent=0 // pred_region
    _
  $region9: #{vonet_forward.4} parent=0 // pred_fallthru
    _
  // Predicated region
  $region10: #{vonet_forward.4} parent=0 // pred_check
    _
  $region11: #{vonet_forward.4} parent=0 // pred_check_branch
    %21 = sbr.rel (0) target = $region13
  $region12: #{vonet_forward.4} parent=0 // pred_region
    _
  $region13: #{vonet_forward.4} parent=0 // pred_fallthru
    _
  // Predicated region
  $region14: #{vonet_forward.4} parent=0 // pred_check
    _
  $region15: #{vonet_forward.4} parent=0 // pred_check_branch
    %23 = sbr.rel (0) target = $region17
  $region16: #{vonet_forward.4} parent=0 // pred_region
    _
  $region17: #{vonet_forward.4} parent=0 // pred_fallthru
    _
  // Predicated region
  $region18: #{vonet_forward.4} parent=0 // pred_check
    _
  $region19: #{vonet_forward.4} parent=0 // pred_check_branch
    %25 = sbr.rel (0) target = $region21
  $region20: #{vonet_forward.4} parent=0 // pred_region
    _
  $region21: #{vonet_forward.4} parent=0 // pred_fallthru
    _
  // Predicated region
  $region22: #{vonet_forward.4} parent=0 // pred_check
    _
  $region23: #{vonet_forward.4} parent=0 // pred_check_branch
    %27 = sbr.rel (0) target = $region25
  $region24: #{vonet_forward.4} parent=0 // pred_region
    _
  $region25: #{vonet_forward.4} parent=0 // pred_fallthru
    _
  // Predicated region
  $region26: #{vonet_forward.4} parent=0 // pred_check
    _
  $region27: #{vonet_forward.4} parent=0 // pred_check_branch
    %29 = sbr.rel (0) target = $region29
  $region28: #{vonet_forward.4} parent=0 // pred_region
    _
  $region29: #{vonet_forward.4} parent=0 // pred_fallthru
    _
  // Predicated region
  $region30: #{vonet_forward.4} parent=0 // pred_check
    _
  $region31: #{vonet_forward.4} parent=0 // pred_check_branch
    %31 = sbr.rel (0) target = $region33
  $region32: #{vonet_forward.4} parent=0 // pred_region
    _
  $region33: #{vonet_forward.4} parent=0 // pred_fallthru
    _
  // Predicated region
  $region34: #{vonet_forward.4} parent=0 // pred_check
    _
  $region35: #{vonet_forward.4} parent=0 // pred_check_branch
    %33 = sbr.rel (0) target = $region37
  $region36: #{vonet_forward.4} parent=0 // pred_region
    _
  $region37: #{vonet_forward.4} parent=0 // pred_fallthru
    _
  // Predicated region
  $region38: #{vonet_forward.4} parent=0 // pred_check
    _
  $region39: #{vonet_forward.4} parent=0 // pred_check_branch
    %35 = sbr.rel (0) target = $region41
  $region40: #{vonet_forward.4} parent=0 // pred_region
    _
  $region41: #{vonet_forward.4} parent=0 // pred_fallthru
    _
  // Predicated region
  $region42: #{vonet_forward.4} parent=0 // pred_check
    _
  $region43: #{vonet_forward.4} parent=0 // pred_check_branch
    %37 = sbr.rel (0) target = $region45
  $region44: #{vonet_forward.4} parent=0 // pred_region
    _
  $region45: #{vonet_forward.4} parent=0 // pred_fallthru
    _
  %v39 = vld [vmem:[%s0] sm:$0xf]
  %v40 = vld [vmem:[%s0 + $0x4] sm:$0xf]
  %v41 = vld [vmem:[%s0 + $0x8] sm:$0xf]
  %v42 = vld [vmem:[%s0 + $0xc] sm:$0xf]
  %v43 = vld [vmem:[%s0 + $0x10] sm:$0xf]
  %v44 = vld [vmem:[%s0 + $0x14] sm:$0xf]
  %v45 = vld [vmem:[%s0 + $0x18] sm:$0xf]
  %v46 = vld [vmem:[%s0 + $0x1c] sm:$0xf]
  %v47 = vld [vmem:[%s0 + $0x20] sm:$0xf]
  %v48 = vld [vmem:[%s0 + $0x24] sm:$0xf]
  %v49 = vld [vmem:[%s0 + $0x28] sm:$0xf]
  %v50 = vld [vmem:[%s0 + $0x2c] sm:$0xf]
  %v51 = vld [vmem:[%s0 + $0x30] sm:$0xf]
  %v52 = vld [vmem:[%s0 + $0x34] sm:$0xf]
  %v53 = vld [vmem:[%s0 + $0x38] sm:$0xf]
  %v54 = vld [vmem:[%s0 + $0x3c] sm:$0xf]
  %v55 = vld [vmem:[%s9] sm:$0x7]
  %v56 = vld [vmem:[%s10] sm:$0x1]
  %v58 = vperm.slane %v56, 0
  %v76 = vunpack.c.l.b16 %v39
  %v77 = vunpack.c.l.b16 %v40
  %v78 = vunpack.c.l.b16 %v41
  %v79 = vunpack.c.l.b16 %v42
  %v80 = vunpack.c.l.b16 %v43
  %v81 = vunpack.c.l.b16 %v44
  %v82 = vunpack.c.l.b16 %v45
  %v83 = vunpack.c.l.b16 %v46
  %v84 = vunpack.c.l.b16 %v47
  %v85 = vunpack.c.l.b16 %v48
  %v86 = vunpack.c.l.b16 %v49
  %v87 = vunpack.c.l.b16 %v50
  %v88 = vunpack.c.l.b16 %v51
  %v89 = vunpack.c.l.b16 %v52
  %v90 = vunpack.c.l.b16 %v53
  %v91 = vunpack.c.l.b16 %v54
  %v92 = vpack.c.b16 %v77, %v76
  %v93 = vpack.c.b16 %v79, %v78
  %v94 = vpack.c.b16 %v81, %v80
  %v95 = vpack.c.b16 %v83, %v82
  %v96 = vpack.c.b16 %v85, %v84
  %v97 = vpack.c.b16 %v87, %v86
  %v98 = vpack.c.b16 %v89, %v88
  %v99 = vpack.c.b16 %v91, %v90
  %vm100 = vcmask 48128
  %v102 = vsel %vm100, %v92, 0
  %v105 = vsel %vm100, %v93, 0
  %v108 = vsel %vm100, %v94, 0
  %v111 = vsel %vm100, %v95, 0
  %v114 = vsel %vm100, %v96, 0
  %v117 = vsel %vm100, %v97, 0
  %v120 = vsel %vm100, %v98, 0
  %v123 = vsel %vm100, %v99, 0
  %vm125 = vcmask 1042432
  %v127 = vsel %vm125, %v55, 0
  %129 = vmatpush.bf16.msra.mxu0 0
  %130 = vmatpush.bf16.msra.mxu0 0
  %131 = vmatpush.bf16.msra.mxu0 0
  %132 = vmatpush.bf16.msra.mxu0 0
  %133 = vmatpush.bf16.msra.mxu0 0
  %134 = vmatpush.bf16.msra.mxu0 0
  %135 = vmatpush.bf16.msra.mxu0 0
  %136 = vmatpush.bf16.msra.mxu0 %v127
  %137 = vmatmul.bf16.gmra.mxu0 %v102
  %v138 = vpop.f32.mrf.mxu0
  %v139 = vadd.f32 %v58, %v138
  %v140 = vpop.f32.mrf.mxu0
  %v141 = vadd.f32 %v58, %v140
  %142 = vmatmul.bf16.gmra.mxu0 %v105
  %v143 = vpop.f32.mrf.mxu0
  %v144 = vadd.f32 %v58, %v143
  %v145 = vpop.f32.mrf.mxu0
  %v146 = vadd.f32 %v58, %v145
  %147 = vmatmul.bf16.gmra.mxu0 %v108
  %v148 = vpop.f32.mrf.mxu0
  %v149 = vadd.f32 %v58, %v148
  %v150 = vpop.f32.mrf.mxu0
  %v151 = vadd.f32 %v58, %v150
  %152 = vmatmul.bf16.gmra.mxu0 %v111
  %v153 = vpop.f32.mrf.mxu0
  %v154 = vadd.f32 %v58, %v153
  %v155 = vpop.f32.mrf.mxu0
  %v156 = vadd.f32 %v58, %v155
  %157 = vmatmul.bf16.gmra.mxu0 %v114
  %v158 = vpop.f32.mrf.mxu0
  %v159 = vadd.f32 %v58, %v158
  %v160 = vpop.f32.mrf.mxu0
  %v161 = vadd.f32 %v58, %v160
  %162 = vmatmul.bf16.gmra.mxu0 %v117
  %v163 = vpop.f32.mrf.mxu0
  %v164 = vadd.f32 %v58, %v163
  %v165 = vpop.f32.mrf.mxu0
  %v166 = vadd.f32 %v58, %v165
  %167 = vmatmul.bf16.gmra.mxu0 %v120
  %v168 = vpop.f32.mrf.mxu0
  %v169 = vadd.f32 %v58, %v168
  %v170 = vpop.f32.mrf.mxu0
  %v171 = vadd.f32 %v58, %v170
  %172 = vmatmul.bf16.gmra.mxu0 %v123
  %v173 = vpop.f32.mrf.mxu0
  %v174 = vadd.f32 %v58, %v173
  %v175 = vpop.f32.mrf.mxu0
  %v176 = vadd.f32 %v58, %v175
  %177 = vdwg.mxu0
  %v178 = vld [vmem:[%s1] sm:$0xf]
  %v179 = vld [vmem:[%s1 + $0x4] sm:$0xf]
  %v180 = vld [vmem:[%s1 + $0x8] sm:$0xf]
  %v181 = vld [vmem:[%s1 + $0xc] sm:$0xf]
  %v182 = vld [vmem:[%s1 + $0x10] sm:$0xf]
  %v183 = vld [vmem:[%s1 + $0x14] sm:$0xf]
  %v184 = vld [vmem:[%s1 + $0x18] sm:$0xf]
  %v185 = vld [vmem:[%s1 + $0x1c] sm:$0xf]
  %v186 = vld [vmem:[%s1 + $0x20] sm:$0xf]
  %v187 = vld [vmem:[%s1 + $0x24] sm:$0xf]
  %v188 = vld [vmem:[%s1 + $0x28] sm:$0xf]
  %v189 = vld [vmem:[%s1 + $0x2c] sm:$0xf]
  %v190 = vld [vmem:[%s1 + $0x30] sm:$0xf]
  %v191 = vld [vmem:[%s1 + $0x34] sm:$0xf]
  %v192 = vld [vmem:[%s1 + $0x38] sm:$0xf]
  %v193 = vld [vmem:[%s1 + $0x3c] sm:$0xf]
  %s194 = scalar_lea.vmem %s9, 4
  %v195 = vld [vmem:[%s194] sm:$0x7]
  %v212 = vunpack.c.l.b16 %v178
  %v213 = vunpack.c.l.b16 %v179
  %v214 = vunpack.c.l.b16 %v180
  %v215 = vunpack.c.l.b16 %v181
  %v216 = vunpack.c.l.b16 %v182
  %v217 = vunpack.c.l.b16 %v183
  %v218 = vunpack.c.l.b16 %v184
  %v219 = vunpack.c.l.b16 %v185
  %v220 = vunpack.c.l.b16 %v186
  %v221 = vunpack.c.l.b16 %v187
  %v222 = vunpack.c.l.b16 %v188
  %v223 = vunpack.c.l.b16 %v189
  %v224 = vunpack.c.l.b16 %v190
  %v225 = vunpack.c.l.b16 %v191
  %v226 = vunpack.c.l.b16 %v192
  %v227 = vunpack.c.l.b16 %v193
  %v228 = vpack.c.b16 %v213, %v212
  %v229 = vpack.c.b16 %v215, %v214
  %v230 = vpack.c.b16 %v217, %v216
  %v231 = vpack.c.b16 %v219, %v218
  %v232 = vpack.c.b16 %v221, %v220
  %v233 = vpack.c.b16 %v223, %v222
  %v234 = vpack.c.b16 %v225, %v224
  %v235 = vpack.c.b16 %v227, %v226
  %v237 = vsel %vm100, %v228, 0
  %v240 = vsel %vm100, %v229, 0
  %v243 = vsel %vm100, %v230, 0
  %v246 = vsel %vm100, %v231, 0
  %v249 = vsel %vm100, %v232, 0
  %v252 = vsel %vm100, %v233, 0
  %v255 = vsel %vm100, %v234, 0
  %v258 = vsel %vm100, %v235, 0
  %v261 = vsel %vm125, %v195, 0
  %263 = vmatpush.bf16.msra.mxu0 0
  %264 = vmatpush.bf16.msra.mxu0 0
  %265 = vmatpush.bf16.msra.mxu0 0
  %266 = vmatpush.bf16.msra.mxu0 0
  %267 = vmatpush.bf16.msra.mxu0 0
  %268 = vmatpush.bf16.msra.mxu0 0
  %269 = vmatpush.bf16.msra.mxu0 0
  %270 = vmatpush.bf16.msra.mxu0 %v261
  %271 = vmatmul.bf16.gmra.mxu0 %v237
  %v272 = vpop.f32.mrf.mxu0
  %v273 = vadd.f32 0.0, %v272
  %v274 = vpop.f32.mrf.mxu0
  %v275 = vadd.f32 0.0, %v274
  %276 = vmatmul.bf16.gmra.mxu0 %v240
  %v277 = vpop.f32.mrf.mxu0
  %v278 = vadd.f32 0.0, %v277
  %v279 = vpop.f32.mrf.mxu0
  %v280 = vadd.f32 0.0, %v279
  %281 = vmatmul.bf16.gmra.mxu0 %v243
  %v282 = vpop.f32.mrf.mxu0
  %v283 = vadd.f32 0.0, %v282
  %v284 = vpop.f32.mrf.mxu0
  %v285 = vadd.f32 0.0, %v284
  %286 = vmatmul.bf16.gmra.mxu0 %v246
  %v287 = vpop.f32.mrf.mxu0
  %v288 = vadd.f32 0.0, %v287
  %v289 = vpop.f32.mrf.mxu0
  %v290 = vadd.f32 0.0, %v289
  %291 = vmatmul.bf16.gmra.mxu0 %v249
  %v292 = vpop.f32.mrf.mxu0
  %v293 = vadd.f32 0.0, %v292
  %v294 = vpop.f32.mrf.mxu0
  %v295 = vadd.f32 0.0, %v294
  %296 = vmatmul.bf16.gmra.mxu0 %v252
  %v297 = vpop.f32.mrf.mxu0
  %v298 = vadd.f32 0.0, %v297
  %v299 = vpop.f32.mrf.mxu0
  %v300 = vadd.f32 0.0, %v299
  %301 = vmatmul.bf16.gmra.mxu0 %v255
  %v302 = vpop.f32.mrf.mxu0
  %v303 = vadd.f32 0.0, %v302
  %v304 = vpop.f32.mrf.mxu0
  %v305 = vadd.f32 0.0, %v304
  %306 = vmatmul.bf16.gmra.mxu0 %v258
  %v307 = vpop.f32.mrf.mxu0
  %v308 = vadd.f32 0.0, %v307
  %v309 = vpop.f32.mrf.mxu0
  %v310 = vadd.f32 0.0, %v309
  %311 = vdwg.mxu0
  %v312 = vadd.f32 %v139, %v273
  %v313 = vadd.f32 %v141, %v275
  %v314 = vadd.f32 %v144, %v278
  %v315 = vadd.f32 %v146, %v280
  %v316 = vadd.f32 %v149, %v283
  %v317 = vadd.f32 %v151, %v285
  %v318 = vadd.f32 %v154, %v288
  %v319 = vadd.f32 %v156, %v290
  %v320 = vadd.f32 %v159, %v293
  %v321 = vadd.f32 %v161, %v295
  %v322 = vadd.f32 %v164, %v298
  %v323 = vadd.f32 %v166, %v300
  %v324 = vadd.f32 %v169, %v303
  %v325 = vadd.f32 %v171, %v305
  %v326 = vadd.f32 %v174, %v308
  %v327 = vadd.f32 %v176, %v310
  %v328 = vld [vmem:[%s2] sm:$0xf]
  %v329 = vld [vmem:[%s2 + $0x4] sm:$0xf]
  %v330 = vld [vmem:[%s2 + $0x8] sm:$0xf]
  %v331 = vld [vmem:[%s2 + $0xc] sm:$0xf]
  %v332 = vld [vmem:[%s2 + $0x10] sm:$0xf]
  %v333 = vld [vmem:[%s2 + $0x14] sm:$0xf]
  %v334 = vld [vmem:[%s2 + $0x18] sm:$0xf]
  %v335 = vld [vmem:[%s2 + $0x1c] sm:$0xf]
  %v336 = vld [vmem:[%s2 + $0x20] sm:$0xf]
  %v337 = vld [vmem:[%s2 + $0x24] sm:$0xf]
  %v338 = vld [vmem:[%s2 + $0x28] sm:$0xf]
  %v339 = vld [vmem:[%s2 + $0x2c] sm:$0xf]
  %v340 = vld [vmem:[%s2 + $0x30] sm:$0xf]
  %v341 = vld [vmem:[%s2 + $0x34] sm:$0xf]
  %v342 = vld [vmem:[%s2 + $0x38] sm:$0xf]
  %v343 = vld [vmem:[%s2 + $0x3c] sm:$0xf]
  %s344 = scalar_lea.vmem %s9, 8
  %v345 = vld [vmem:[%s344] sm:$0x7]
  %v362 = vunpack.c.l.b16 %v328
  %v363 = vunpack.c.l.b16 %v329
  %v364 = vunpack.c.l.b16 %v330
  %v365 = vunpack.c.l.b16 %v331
  %v366 = vunpack.c.l.b16 %v332
  %v367 = vunpack.c.l.b16 %v333
  %v368 = vunpack.c.l.b16 %v334
  %v369 = vunpack.c.l.b16 %v335
  %v370 = vunpack.c.l.b16 %v336
  %v371 = vunpack.c.l.b16 %v337
  %v372 = vunpack.c.l.b16 %v338
  %v373 = vunpack.c.l.b16 %v339
  %v374 = vunpack.c.l.b16 %v340
  %v375 = vunpack.c.l.b16 %v341
  %v376 = vunpack.c.l.b16 %v342
  %v377 = vunpack.c.l.b16 %v343
  %v378 = vpack.c.b16 %v363, %v362
  %v379 = vpack.c.b16 %v365, %v364
  %v380 = vpack.c.b16 %v367, %v366
  %v381 = vpack.c.b16 %v369, %v368
  %v382 = vpack.c.b16 %v371, %v370
  %v383 = vpack.c.b16 %v373, %v372
  %v384 = vpack.c.b16 %v375, %v374
  %v385 = vpack.c.b16 %v377, %v376
  %v387 = vsel %vm100, %v378, 0
  %v390 = vsel %vm100, %v379, 0
  %v393 = vsel %vm100, %v380, 0
  %v396 = vsel %vm100, %v381, 0
  %v399 = vsel %vm100, %v382, 0
  %v402 = vsel %vm100, %v383, 0
  %v405 = vsel %vm100, %v384, 0
  %v408 = vsel %vm100, %v385, 0
  %v411 = vsel %vm125, %v345, 0
  %413 = vmatpush.bf16.msra.mxu0 0
  %414 = vmatpush.bf16.msra.mxu0 0
  %415 = vmatpush.bf16.msra.mxu0 0
  %416 = vmatpush.bf16.msra.mxu0 0
  %417 = vmatpush.bf16.msra.mxu0 0
  %418 = vmatpush.bf16.msra.mxu0 0
  %419 = vmatpush.bf16.msra.mxu0 0
  %420 = vmatpush.bf16.msra.mxu0 %v411
  %421 = vmatmul.bf16.gmra.mxu0 %v387
  %v422 = vpop.f32.mrf.mxu0
  %v423 = vadd.f32 0.0, %v422
  %v424 = vpop.f32.mrf.mxu0
  %v425 = vadd.f32 0.0, %v424
  %426 = vmatmul.bf16.gmra.mxu0 %v390
  %v427 = vpop.f32.mrf.mxu0
  %v428 = vadd.f32 0.0, %v427
  %v429 = vpop.f32.mrf.mxu0
  %v430 = vadd.f32 0.0, %v429
  %431 = vmatmul.bf16.gmra.mxu0 %v393
  %v432 = vpop.f32.mrf.mxu0
  %v433 = vadd.f32 0.0, %v432
  %v434 = vpop.f32.mrf.mxu0
  %v435 = vadd.f32 0.0, %v434
  %436 = vmatmul.bf16.gmra.mxu0 %v396
  %v437 = vpop.f32.mrf.mxu0
  %v438 = vadd.f32 0.0, %v437
  %v439 = vpop.f32.mrf.mxu0
  %v440 = vadd.f32 0.0, %v439
  %441 = vmatmul.bf16.gmra.mxu0 %v399
  %v442 = vpop.f32.mrf.mxu0
  %v443 = vadd.f32 0.0, %v442
  %v444 = vpop.f32.mrf.mxu0
  %v445 = vadd.f32 0.0, %v444
  %446 = vmatmul.bf16.gmra.mxu0 %v402
  %v447 = vpop.f32.mrf.mxu0
  %v448 = vadd.f32 0.0, %v447
  %v449 = vpop.f32.mrf.mxu0
  %v450 = vadd.f32 0.0, %v449
  %451 = vmatmul.bf16.gmra.mxu0 %v405
  %v452 = vpop.f32.mrf.mxu0
  %v453 = vadd.f32 0.0, %v452
  %v454 = vpop.f32.mrf.mxu0
  %v455 = vadd.f32 0.0, %v454
  %456 = vmatmul.bf16.gmra.mxu0 %v408
  %v457 = vpop.f32.mrf.mxu0
  %v458 = vadd.f32 0.0, %v457
  %v459 = vpop.f32.mrf.mxu0
  %v460 = vadd.f32 0.0, %v459
  %461 = vdwg.mxu0
  %v462 = vadd.f32 %v312, %v423
  %v463 = vadd.f32 %v313, %v425
  %v464 = vadd.f32 %v314, %v428
  %v465 = vadd.f32 %v315, %v430
  %v466 = vadd.f32 %v316, %v433
  %v467 = vadd.f32 %v317, %v435
  %v468 = vadd.f32 %v318, %v438
  %v469 = vadd.f32 %v319, %v440
  %v470 = vadd.f32 %v320, %v443
  %v471 = vadd.f32 %v321, %v445
  %v472 = vadd.f32 %v322, %v448
  %v473 = vadd.f32 %v323, %v450
  %v474 = vadd.f32 %v324, %v453
  %v475 = vadd.f32 %v325, %v455
  %v476 = vadd.f32 %v326, %v458
  %v477 = vadd.f32 %v327, %v460
  %v478 = vld [vmem:[%s3] sm:$0xf]
  %v479 = vld [vmem:[%s3 + $0x4] sm:$0xf]
  %v480 = vld [vmem:[%s3 + $0x8] sm:$0xf]
  %v481 = vld [vmem:[%s3 + $0xc] sm:$0xf]
  %v482 = vld [vmem:[%s3 + $0x10] sm:$0xf]
  %v483 = vld [vmem:[%s3 + $0x14] sm:$0xf]
  %v484 = vld [vmem:[%s3 + $0x18] sm:$0xf]
  %v485 = vld [vmem:[%s3 + $0x1c] sm:$0xf]
  %v486 = vld [vmem:[%s3 + $0x20] sm:$0xf]
  %v487 = vld [vmem:[%s3 + $0x24] sm:$0xf]
  %v488 = vld [vmem:[%s3 + $0x28] sm:$0xf]
  %v489 = vld [vmem:[%s3 + $0x2c] sm:$0xf]
  %v490 = vld [vmem:[%s3 + $0x30] sm:$0xf]
  %v491 = vld [vmem:[%s3 + $0x34] sm:$0xf]
  %v492 = vld [vmem:[%s3 + $0x38] sm:$0xf]
  %v493 = vld [vmem:[%s3 + $0x3c] sm:$0xf]
  %s494 = scalar_lea.vmem %s9, 12
  %v495 = vld [vmem:[%s494] sm:$0x7]
  %v512 = vunpack.c.l.b16 %v478
  %v513 = vunpack.c.l.b16 %v479
  %v514 = vunpack.c.l.b16 %v480
  %v515 = vunpack.c.l.b16 %v481
  %v516 = vunpack.c.l.b16 %v482
  %v517 = vunpack.c.l.b16 %v483
  %v518 = vunpack.c.l.b16 %v484
  %v519 = vunpack.c.l.b16 %v485
  %v520 = vunpack.c.l.b16 %v486
  %v521 = vunpack.c.l.b16 %v487
  %v522 = vunpack.c.l.b16 %v488
  %v523 = vunpack.c.l.b16 %v489
  %v524 = vunpack.c.l.b16 %v490
  %v525 = vunpack.c.l.b16 %v491
  %v526 = vunpack.c.l.b16 %v492
  %v527 = vunpack.c.l.b16 %v493
  %v528 = vpack.c.b16 %v513, %v512
  %v529 = vpack.c.b16 %v515, %v514
  %v530 = vpack.c.b16 %v517, %v516
  %v531 = vpack.c.b16 %v519, %v518
  %v532 = vpack.c.b16 %v521, %v520
  %v533 = vpack.c.b16 %v523, %v522
  %v534 = vpack.c.b16 %v525, %v524
  %v535 = vpack.c.b16 %v527, %v526
  %v537 = vsel %vm100, %v528, 0
  %v540 = vsel %vm100, %v529, 0
  %v543 = vsel %vm100, %v530, 0
  %v546 = vsel %vm100, %v531, 0
  %v549 = vsel %vm100, %v532, 0
  %v552 = vsel %vm100, %v533, 0
  %v555 = vsel %vm100, %v534, 0
  %v558 = vsel %vm100, %v535, 0
  %v561 = vsel %vm125, %v495, 0
  %563 = vmatpush.bf16.msra.mxu0 0
  %564 = vmatpush.bf16.msra.mxu0 0
  %565 = vmatpush.bf16.msra.mxu0 0
  %566 = vmatpush.bf16.msra.mxu0 0
  %567 = vmatpush.bf16.msra.mxu0 0
  %568 = vmatpush.bf16.msra.mxu0 0
  %569 = vmatpush.bf16.msra.mxu0 0
  %570 = vmatpush.bf16.msra.mxu0 %v561
  %571 = vmatmul.bf16.gmra.mxu0 %v537
  %v572 = vpop.f32.mrf.mxu0
  %v573 = vadd.f32 0.0, %v572
  %v574 = vpop.f32.mrf.mxu0
  %v575 = vadd.f32 0.0, %v574
  %576 = vmatmul.bf16.gmra.mxu0 %v540
  %v577 = vpop.f32.mrf.mxu0
  %v578 = vadd.f32 0.0, %v577
  %v579 = vpop.f32.mrf.mxu0
  %v580 = vadd.f32 0.0, %v579
  %581 = vmatmul.bf16.gmra.mxu0 %v543
  %v582 = vpop.f32.mrf.mxu0
  %v583 = vadd.f32 0.0, %v582
  %v584 = vpop.f32.mrf.mxu0
  %v585 = vadd.f32 0.0, %v584
  %586 = vmatmul.bf16.gmra.mxu0 %v546
  %v587 = vpop.f32.mrf.mxu0
  %v588 = vadd.f32 0.0, %v587
  %v589 = vpop.f32.mrf.mxu0
  %v590 = vadd.f32 0.0, %v589
  %591 = vmatmul.bf16.gmra.mxu0 %v549
  %v592 = vpop.f32.mrf.mxu0
  %v593 = vadd.f32 0.0, %v592
  %v594 = vpop.f32.mrf.mxu0
  %v595 = vadd.f32 0.0, %v594
  %596 = vmatmul.bf16.gmra.mxu0 %v552
  %v597 = vpop.f32.mrf.mxu0
  %v598 = vadd.f32 0.0, %v597
  %v599 = vpop.f32.mrf.mxu0
  %v600 = vadd.f32 0.0, %v599
  %601 = vmatmul.bf16.gmra.mxu0 %v555
  %v602 = vpop.f32.mrf.mxu0
  %v603 = vadd.f32 0.0, %v602
  %v604 = vpop.f32.mrf.mxu0
  %v605 = vadd.f32 0.0, %v604
  %606 = vmatmul.bf16.gmra.mxu0 %v558
  %v607 = vpop.f32.mrf.mxu0
  %v608 = vadd.f32 0.0, %v607
  %v609 = vpop.f32.mrf.mxu0
  %v610 = vadd.f32 0.0, %v609
  %611 = vdwg.mxu0
  %v612 = vadd.f32 %v462, %v573
  %v613 = vadd.f32 %v463, %v575
  %v614 = vadd.f32 %v464, %v578
  %v615 = vadd.f32 %v465, %v580
  %v616 = vadd.f32 %v466, %v583
  %v617 = vadd.f32 %v467, %v585
  %v618 = vadd.f32 %v468, %v588
  %v619 = vadd.f32 %v469, %v590
  %v620 = vadd.f32 %v470, %v593
  %v621 = vadd.f32 %v471, %v595
  %v622 = vadd.f32 %v472, %v598
  %v623 = vadd.f32 %v473, %v600
  %v624 = vadd.f32 %v474, %v603
  %v625 = vadd.f32 %v475, %v605
  %v626 = vadd.f32 %v476, %v608
  %v627 = vadd.f32 %v477, %v610
  %v628 = vld [vmem:[%s4] sm:$0xf]
  %v629 = vld [vmem:[%s4 + $0x4] sm:$0xf]
  %v630 = vld [vmem:[%s4 + $0x8] sm:$0xf]
  %v631 = vld [vmem:[%s4 + $0xc] sm:$0xf]
  %v632 = vld [vmem:[%s4 + $0x10] sm:$0xf]
  %v633 = vld [vmem:[%s4 + $0x14] sm:$0xf]
  %v634 = vld [vmem:[%s4 + $0x18] sm:$0xf]
  %v635 = vld [vmem:[%s4 + $0x1c] sm:$0xf]
  %v636 = vld [vmem:[%s4 + $0x20] sm:$0xf]
  %v637 = vld [vmem:[%s4 + $0x24] sm:$0xf]
  %v638 = vld [vmem:[%s4 + $0x28] sm:$0xf]
  %v639 = vld [vmem:[%s4 + $0x2c] sm:$0xf]
  %v640 = vld [vmem:[%s4 + $0x30] sm:$0xf]
  %v641 = vld [vmem:[%s4 + $0x34] sm:$0xf]
  %v642 = vld [vmem:[%s4 + $0x38] sm:$0xf]
  %v643 = vld [vmem:[%s4 + $0x3c] sm:$0xf]
  %s644 = scalar_lea.vmem %s9, 16
  %v645 = vld [vmem:[%s644] sm:$0x7]
  %v662 = vunpack.c.l.b16 %v628
  %v663 = vunpack.c.l.b16 %v629
  %v664 = vunpack.c.l.b16 %v630
  %v665 = vunpack.c.l.b16 %v631
  %v666 = vunpack.c.l.b16 %v632
  %v667 = vunpack.c.l.b16 %v633
  %v668 = vunpack.c.l.b16 %v634
  %v669 = vunpack.c.l.b16 %v635
  %v670 = vunpack.c.l.b16 %v636
  %v671 = vunpack.c.l.b16 %v637
  %v672 = vunpack.c.l.b16 %v638
  %v673 = vunpack.c.l.b16 %v639
  %v674 = vunpack.c.l.b16 %v640
  %v675 = vunpack.c.l.b16 %v641
  %v676 = vunpack.c.l.b16 %v642
  %v677 = vunpack.c.l.b16 %v643
  %v678 = vpack.c.b16 %v663, %v662
  %v679 = vpack.c.b16 %v665, %v664
  %v680 = vpack.c.b16 %v667, %v666
  %v681 = vpack.c.b16 %v669, %v668
  %v682 = vpack.c.b16 %v671, %v670
  %v683 = vpack.c.b16 %v673, %v672
  %v684 = vpack.c.b16 %v675, %v674
  %v685 = vpack.c.b16 %v677, %v676
  %v687 = vsel %vm100, %v678, 0
  %v690 = vsel %vm100, %v679, 0
  %v693 = vsel %vm100, %v680, 0
  %v696 = vsel %vm100, %v681, 0
  %v699 = vsel %vm100, %v682, 0
  %v702 = vsel %vm100, %v683, 0
  %v705 = vsel %vm100, %v684, 0
  %v708 = vsel %vm100, %v685, 0
  %v711 = vsel %vm125, %v645, 0
  %713 = vmatpush.bf16.msra.mxu0 0
  %714 = vmatpush.bf16.msra.mxu0 0
  %715 = vmatpush.bf16.msra.mxu0 0
  %716 = vmatpush.bf16.msra.mxu0 0
  %717 = vmatpush.bf16.msra.mxu0 0
  %718 = vmatpush.bf16.msra.mxu0 0
  %719 = vmatpush.bf16.msra.mxu0 0
  %720 = vmatpush.bf16.msra.mxu0 %v711
  %721 = vmatmul.bf16.gmra.mxu0 %v687
  %v722 = vpop.f32.mrf.mxu0
  %v723 = vadd.f32 0.0, %v722
  %v724 = vpop.f32.mrf.mxu0
  %v725 = vadd.f32 0.0, %v724
  %726 = vmatmul.bf16.gmra.mxu0 %v690
  %v727 = vpop.f32.mrf.mxu0
  %v728 = vadd.f32 0.0, %v727
  %v729 = vpop.f32.mrf.mxu0
  %v730 = vadd.f32 0.0, %v729
  %731 = vmatmul.bf16.gmra.mxu0 %v693
  %v732 = vpop.f32.mrf.mxu0
  %v733 = vadd.f32 0.0, %v732
  %v734 = vpop.f32.mrf.mxu0
  %v735 = vadd.f32 0.0, %v734
  %736 = vmatmul.bf16.gmra.mxu0 %v696
  %v737 = vpop.f32.mrf.mxu0
  %v738 = vadd.f32 0.0, %v737
  %v739 = vpop.f32.mrf.mxu0
  %v740 = vadd.f32 0.0, %v739
  %741 = vmatmul.bf16.gmra.mxu0 %v699
  %v742 = vpop.f32.mrf.mxu0
  %v743 = vadd.f32 0.0, %v742
  %v744 = vpop.f32.mrf.mxu0
  %v745 = vadd.f32 0.0, %v744
  %746 = vmatmul.bf16.gmra.mxu0 %v702
  %v747 = vpop.f32.mrf.mxu0
  %v748 = vadd.f32 0.0, %v747
  %v749 = vpop.f32.mrf.mxu0
  %v750 = vadd.f32 0.0, %v749
  %751 = vmatmul.bf16.gmra.mxu0 %v705
  %v752 = vpop.f32.mrf.mxu0
  %v753 = vadd.f32 0.0, %v752
  %v754 = vpop.f32.mrf.mxu0
  %v755 = vadd.f32 0.0, %v754
  %756 = vmatmul.bf16.gmra.mxu0 %v708
  %v757 = vpop.f32.mrf.mxu0
  %v758 = vadd.f32 0.0, %v757
  %v759 = vpop.f32.mrf.mxu0
  %v760 = vadd.f32 0.0, %v759
  %761 = vdwg.mxu0
  %v762 = vadd.f32 %v612, %v723
  %v763 = vadd.f32 %v613, %v725
  %v764 = vadd.f32 %v614, %v728
  %v765 = vadd.f32 %v615, %v730
  %v766 = vadd.f32 %v616, %v733
  %v767 = vadd.f32 %v617, %v735
  %v768 = vadd.f32 %v618, %v738
  %v769 = vadd.f32 %v619, %v740
  %v770 = vadd.f32 %v620, %v743
  %v771 = vadd.f32 %v621, %v745
  %v772 = vadd.f32 %v622, %v748
  %v773 = vadd.f32 %v623, %v750
  %v774 = vadd.f32 %v624, %v753
  %v775 = vadd.f32 %v625, %v755
  %v776 = vadd.f32 %v626, %v758
  %v777 = vadd.f32 %v627, %v760
  %v778 = vld [vmem:[%s5] sm:$0xf]
  %v779 = vld [vmem:[%s5 + $0x4] sm:$0xf]
  %v780 = vld [vmem:[%s5 + $0x8] sm:$0xf]
  %v781 = vld [vmem:[%s5 + $0xc] sm:$0xf]
  %v782 = vld [vmem:[%s5 + $0x10] sm:$0xf]
  %v783 = vld [vmem:[%s5 + $0x14] sm:$0xf]
  %v784 = vld [vmem:[%s5 + $0x18] sm:$0xf]
  %v785 = vld [vmem:[%s5 + $0x1c] sm:$0xf]
  %v786 = vld [vmem:[%s5 + $0x20] sm:$0xf]
  %v787 = vld [vmem:[%s5 + $0x24] sm:$0xf]
  %v788 = vld [vmem:[%s5 + $0x28] sm:$0xf]
  %v789 = vld [vmem:[%s5 + $0x2c] sm:$0xf]
  %v790 = vld [vmem:[%s5 + $0x30] sm:$0xf]
  %v791 = vld [vmem:[%s5 + $0x34] sm:$0xf]
  %v792 = vld [vmem:[%s5 + $0x38] sm:$0xf]
  %v793 = vld [vmem:[%s5 + $0x3c] sm:$0xf]
  %s794 = scalar_lea.vmem %s9, 20
  %v795 = vld [vmem:[%s794] sm:$0x7]
  %v812 = vunpack.c.l.b16 %v778
  %v813 = vunpack.c.l.b16 %v779
  %v814 = vunpack.c.l.b16 %v780
  %v815 = vunpack.c.l.b16 %v781
  %v816 = vunpack.c.l.b16 %v782
  %v817 = vunpack.c.l.b16 %v783
  %v818 = vunpack.c.l.b16 %v784
  %v819 = vunpack.c.l.b16 %v785
  %v820 = vunpack.c.l.b16 %v786
  %v821 = vunpack.c.l.b16 %v787
  %v822 = vunpack.c.l.b16 %v788
  %v823 = vunpack.c.l.b16 %v789
  %v824 = vunpack.c.l.b16 %v790
  %v825 = vunpack.c.l.b16 %v791
  %v826 = vunpack.c.l.b16 %v792
  %v827 = vunpack.c.l.b16 %v793
  %v828 = vpack.c.b16 %v813, %v812
  %v829 = vpack.c.b16 %v815, %v814
  %v830 = vpack.c.b16 %v817, %v816
  %v831 = vpack.c.b16 %v819, %v818
  %v832 = vpack.c.b16 %v821, %v820
  %v833 = vpack.c.b16 %v823, %v822
  %v834 = vpack.c.b16 %v825, %v824
  %v835 = vpack.c.b16 %v827, %v826
  %v837 = vsel %vm100, %v828, 0
  %v840 = vsel %vm100, %v829, 0
  %v843 = vsel %vm100, %v830, 0
  %v846 = vsel %vm100, %v831, 0
  %v849 = vsel %vm100, %v832, 0
  %v852 = vsel %vm100, %v833, 0
  %v855 = vsel %vm100, %v834, 0
  %v858 = vsel %vm100, %v835, 0
  %v861 = vsel %vm125, %v795, 0
  %863 = vmatpush.bf16.msra.mxu0 0
  %864 = vmatpush.bf16.msra.mxu0 0
  %865 = vmatpush.bf16.msra.mxu0 0
  %866 = vmatpush.bf16.msra.mxu0 0
  %867 = vmatpush.bf16.msra.mxu0 0
  %868 = vmatpush.bf16.msra.mxu0 0
  %869 = vmatpush.bf16.msra.mxu0 0
  %870 = vmatpush.bf16.msra.mxu0 %v861
  %871 = vmatmul.bf16.gmra.mxu0 %v837
  %v872 = vpop.f32.mrf.mxu0
  %v873 = vadd.f32 0.0, %v872
  %v874 = vpop.f32.mrf.mxu0
  %v875 = vadd.f32 0.0, %v874
  %876 = vmatmul.bf16.gmra.mxu0 %v840
  %v877 = vpop.f32.mrf.mxu0
  %v878 = vadd.f32 0.0, %v877
  %v879 = vpop.f32.mrf.mxu0
  %v880 = vadd.f32 0.0, %v879
  %881 = vmatmul.bf16.gmra.mxu0 %v843
  %v882 = vpop.f32.mrf.mxu0
  %v883 = vadd.f32 0.0, %v882
  %v884 = vpop.f32.mrf.mxu0
  %v885 = vadd.f32 0.0, %v884
  %886 = vmatmul.bf16.gmra.mxu0 %v846
  %v887 = vpop.f32.mrf.mxu0
  %v888 = vadd.f32 0.0, %v887
  %v889 = vpop.f32.mrf.mxu0
  %v890 = vadd.f32 0.0, %v889
  %891 = vmatmul.bf16.gmra.mxu0 %v849
  %v892 = vpop.f32.mrf.mxu0
  %v893 = vadd.f32 0.0, %v892
  %v894 = vpop.f32.mrf.mxu0
  %v895 = vadd.f32 0.0, %v894
  %896 = vmatmul.bf16.gmra.mxu0 %v852
  %v897 = vpop.f32.mrf.mxu0
  %v898 = vadd.f32 0.0, %v897
  %v899 = vpop.f32.mrf.mxu0
  %v900 = vadd.f32 0.0, %v899
  %901 = vmatmul.bf16.gmra.mxu0 %v855
  %v902 = vpop.f32.mrf.mxu0
  %v903 = vadd.f32 0.0, %v902
  %v904 = vpop.f32.mrf.mxu0
  %v905 = vadd.f32 0.0, %v904
  %906 = vmatmul.bf16.gmra.mxu0 %v858
  %v907 = vpop.f32.mrf.mxu0
  %v908 = vadd.f32 0.0, %v907
  %v909 = vpop.f32.mrf.mxu0
  %v910 = vadd.f32 0.0, %v909
  %911 = vdwg.mxu0
  %v912 = vadd.f32 %v762, %v873
  %v913 = vadd.f32 %v763, %v875
  %v914 = vadd.f32 %v764, %v878
  %v915 = vadd.f32 %v765, %v880
  %v916 = vadd.f32 %v766, %v883
  %v917 = vadd.f32 %v767, %v885
  %v918 = vadd.f32 %v768, %v888
  %v919 = vadd.f32 %v769, %v890
  %v920 = vadd.f32 %v770, %v893
  %v921 = vadd.f32 %v771, %v895
  %v922 = vadd.f32 %v772, %v898
  %v923 = vadd.f32 %v773, %v900
  %v924 = vadd.f32 %v774, %v903
  %v925 = vadd.f32 %v775, %v905
  %v926 = vadd.f32 %v776, %v908
  %v927 = vadd.f32 %v777, %v910
  %v928 = vld [vmem:[%s6] sm:$0xf]
  %v929 = vld [vmem:[%s6 + $0x4] sm:$0xf]
  %v930 = vld [vmem:[%s6 + $0x8] sm:$0xf]
  %v931 = vld [vmem:[%s6 + $0xc] sm:$0xf]
  %v932 = vld [vmem:[%s6 + $0x10] sm:$0xf]
  %v933 = vld [vmem:[%s6 + $0x14] sm:$0xf]
  %v934 = vld [vmem:[%s6 + $0x18] sm:$0xf]
  %v935 = vld [vmem:[%s6 + $0x1c] sm:$0xf]
  %v936 = vld [vmem:[%s6 + $0x20] sm:$0xf]
  %v937 = vld [vmem:[%s6 + $0x24] sm:$0xf]
  %v938 = vld [vmem:[%s6 + $0x28] sm:$0xf]
  %v939 = vld [vmem:[%s6 + $0x2c] sm:$0xf]
  %v940 = vld [vmem:[%s6 + $0x30] sm:$0xf]
  %v941 = vld [vmem:[%s6 + $0x34] sm:$0xf]
  %v942 = vld [vmem:[%s6 + $0x38] sm:$0xf]
  %v943 = vld [vmem:[%s6 + $0x3c] sm:$0xf]
  %s944 = scalar_lea.vmem %s9, 24
  %v945 = vld [vmem:[%s944] sm:$0x7]
  %v962 = vunpack.c.l.b16 %v928
  %v963 = vunpack.c.l.b16 %v929
  %v964 = vunpack.c.l.b16 %v930
  %v965 = vunpack.c.l.b16 %v931
  %v966 = vunpack.c.l.b16 %v932
  %v967 = vunpack.c.l.b16 %v933
  %v968 = vunpack.c.l.b16 %v934
  %v969 = vunpack.c.l.b16 %v935
  %v970 = vunpack.c.l.b16 %v936
  %v971 = vunpack.c.l.b16 %v937
  %v972 = vunpack.c.l.b16 %v938
  %v973 = vunpack.c.l.b16 %v939
  %v974 = vunpack.c.l.b16 %v940
  %v975 = vunpack.c.l.b16 %v941
  %v976 = vunpack.c.l.b16 %v942
  %v977 = vunpack.c.l.b16 %v943
  %v978 = vpack.c.b16 %v963, %v962
  %v979 = vpack.c.b16 %v965, %v964
  %v980 = vpack.c.b16 %v967, %v966
  %v981 = vpack.c.b16 %v969, %v968
  %v982 = vpack.c.b16 %v971, %v970
  %v983 = vpack.c.b16 %v973, %v972
  %v984 = vpack.c.b16 %v975, %v974
  %v985 = vpack.c.b16 %v977, %v976
  %v987 = vsel %vm100, %v978, 0
  %v990 = vsel %vm100, %v979, 0
  %v993 = vsel %vm100, %v980, 0
  %v996 = vsel %vm100, %v981, 0
  %v999 = vsel %vm100, %v982, 0
  %v1002 = vsel %vm100, %v983, 0
  %v1005 = vsel %vm100, %v984, 0
  %v1008 = vsel %vm100, %v985, 0
  %v1011 = vsel %vm125, %v945, 0
  %1013 = vmatpush.bf16.msra.mxu0 0
  %1014 = vmatpush.bf16.msra.mxu0 0
  %1015 = vmatpush.bf16.msra.mxu0 0
  %1016 = vmatpush.bf16.msra.mxu0 0
  %1017 = vmatpush.bf16.msra.mxu0 0
  %1018 = vmatpush.bf16.msra.mxu0 0
  %1019 = vmatpush.bf16.msra.mxu0 0
  %1020 = vmatpush.bf16.msra.mxu0 %v1011
  %1021 = vmatmul.bf16.gmra.mxu0 %v987
  %v1022 = vpop.f32.mrf.mxu0
  %v1023 = vadd.f32 0.0, %v1022
  %v1024 = vpop.f32.mrf.mxu0
  %v1025 = vadd.f32 0.0, %v1024
  %1026 = vmatmul.bf16.gmra.mxu0 %v990
  %v1027 = vpop.f32.mrf.mxu0
  %v1028 = vadd.f32 0.0, %v1027
  %v1029 = vpop.f32.mrf.mxu0
  %v1030 = vadd.f32 0.0, %v1029
  %1031 = vmatmul.bf16.gmra.mxu0 %v993
  %v1032 = vpop.f32.mrf.mxu0
  %v1033 = vadd.f32 0.0, %v1032
  %v1034 = vpop.f32.mrf.mxu0
  %v1035 = vadd.f32 0.0, %v1034
  %1036 = vmatmul.bf16.gmra.mxu0 %v996
  %v1037 = vpop.f32.mrf.mxu0
  %v1038 = vadd.f32 0.0, %v1037
  %v1039 = vpop.f32.mrf.mxu0
  %v1040 = vadd.f32 0.0, %v1039
  %1041 = vmatmul.bf16.gmra.mxu0 %v999
  %v1042 = vpop.f32.mrf.mxu0
  %v1043 = vadd.f32 0.0, %v1042
  %v1044 = vpop.f32.mrf.mxu0
  %v1045 = vadd.f32 0.0, %v1044
  %1046 = vmatmul.bf16.gmra.mxu0 %v1002
  %v1047 = vpop.f32.mrf.mxu0
  %v1048 = vadd.f32 0.0, %v1047
  %v1049 = vpop.f32.mrf.mxu0
  %v1050 = vadd.f32 0.0, %v1049
  %1051 = vmatmul.bf16.gmra.mxu0 %v1005
  %v1052 = vpop.f32.mrf.mxu0
  %v1053 = vadd.f32 0.0, %v1052
  %v1054 = vpop.f32.mrf.mxu0
  %v1055 = vadd.f32 0.0, %v1054
  %1056 = vmatmul.bf16.gmra.mxu0 %v1008
  %v1057 = vpop.f32.mrf.mxu0
  %v1058 = vadd.f32 0.0, %v1057
  %v1059 = vpop.f32.mrf.mxu0
  %v1060 = vadd.f32 0.0, %v1059
  %1061 = vdwg.mxu0
  %v1062 = vadd.f32 %v912, %v1023
  %v1063 = vadd.f32 %v913, %v1025
  %v1064 = vadd.f32 %v914, %v1028
  %v1065 = vadd.f32 %v915, %v1030
  %v1066 = vadd.f32 %v916, %v1033
  %v1067 = vadd.f32 %v917, %v1035
  %v1068 = vadd.f32 %v918, %v1038
  %v1069 = vadd.f32 %v919, %v1040
  %v1070 = vadd.f32 %v920, %v1043
  %v1071 = vadd.f32 %v921, %v1045
  %v1072 = vadd.f32 %v922, %v1048
  %v1073 = vadd.f32 %v923, %v1050
  %v1074 = vadd.f32 %v924, %v1053
  %v1075 = vadd.f32 %v925, %v1055
  %v1076 = vadd.f32 %v926, %v1058
  %v1077 = vadd.f32 %v927, %v1060
  %v1078 = vld [vmem:[%s7] sm:$0xf]
  %v1079 = vld [vmem:[%s7 + $0x4] sm:$0xf]
  %v1080 = vld [vmem:[%s7 + $0x8] sm:$0xf]
  %v1081 = vld [vmem:[%s7 + $0xc] sm:$0xf]
  %v1082 = vld [vmem:[%s7 + $0x10] sm:$0xf]
  %v1083 = vld [vmem:[%s7 + $0x14] sm:$0xf]
  %v1084 = vld [vmem:[%s7 + $0x18] sm:$0xf]
  %v1085 = vld [vmem:[%s7 + $0x1c] sm:$0xf]
  %v1086 = vld [vmem:[%s7 + $0x20] sm:$0xf]
  %v1087 = vld [vmem:[%s7 + $0x24] sm:$0xf]
  %v1088 = vld [vmem:[%s7 + $0x28] sm:$0xf]
  %v1089 = vld [vmem:[%s7 + $0x2c] sm:$0xf]
  %v1090 = vld [vmem:[%s7 + $0x30] sm:$0xf]
  %v1091 = vld [vmem:[%s7 + $0x34] sm:$0xf]
  %v1092 = vld [vmem:[%s7 + $0x38] sm:$0xf]
  %v1093 = vld [vmem:[%s7 + $0x3c] sm:$0xf]
  %s1094 = scalar_lea.vmem %s9, 28
  %v1095 = vld [vmem:[%s1094] sm:$0x7]
  %v1112 = vunpack.c.l.b16 %v1078
  %v1113 = vunpack.c.l.b16 %v1079
  %v1114 = vunpack.c.l.b16 %v1080
  %v1115 = vunpack.c.l.b16 %v1081
  %v1116 = vunpack.c.l.b16 %v1082
  %v1117 = vunpack.c.l.b16 %v1083
  %v1118 = vunpack.c.l.b16 %v1084
  %v1119 = vunpack.c.l.b16 %v1085
  %v1120 = vunpack.c.l.b16 %v1086
  %v1121 = vunpack.c.l.b16 %v1087
  %v1122 = vunpack.c.l.b16 %v1088
  %v1123 = vunpack.c.l.b16 %v1089
  %v1124 = vunpack.c.l.b16 %v1090
  %v1125 = vunpack.c.l.b16 %v1091
  %v1126 = vunpack.c.l.b16 %v1092
  %v1127 = vunpack.c.l.b16 %v1093
  %v1128 = vpack.c.b16 %v1113, %v1112
  %v1129 = vpack.c.b16 %v1115, %v1114
  %v1130 = vpack.c.b16 %v1117, %v1116
  %v1131 = vpack.c.b16 %v1119, %v1118
  %v1132 = vpack.c.b16 %v1121, %v1120
  %v1133 = vpack.c.b16 %v1123, %v1122
  %v1134 = vpack.c.b16 %v1125, %v1124
  %v1135 = vpack.c.b16 %v1127, %v1126
  %v1137 = vsel %vm100, %v1128, 0
  %v1140 = vsel %vm100, %v1129, 0
  %v1143 = vsel %vm100, %v1130, 0
  %v1146 = vsel %vm100, %v1131, 0
  %v1149 = vsel %vm100, %v1132, 0
  %v1152 = vsel %vm100, %v1133, 0
  %v1155 = vsel %vm100, %v1134, 0
  %v1158 = vsel %vm100, %v1135, 0
  %v1161 = vsel %vm125, %v1095, 0
  %1163 = vmatpush.bf16.msra.mxu0 0
  %1164 = vmatpush.bf16.msra.mxu0 0
  %1165 = vmatpush.bf16.msra.mxu0 0
  %1166 = vmatpush.bf16.msra.mxu0 0
  %1167 = vmatpush.bf16.msra.mxu0 0
  %1168 = vmatpush.bf16.msra.mxu0 0
  %1169 = vmatpush.bf16.msra.mxu0 0
  %1170 = vmatpush.bf16.msra.mxu0 %v1161
  %1171 = vmatmul.bf16.gmra.mxu0 %v1137
  %v1172 = vpop.f32.mrf.mxu0
  %v1173 = vadd.f32 0.0, %v1172
  %v1174 = vpop.f32.mrf.mxu0
  %v1175 = vadd.f32 0.0, %v1174
  %1176 = vmatmul.bf16.gmra.mxu0 %v1140
  %v1177 = vpop.f32.mrf.mxu0
  %v1178 = vadd.f32 0.0, %v1177
  %v1179 = vpop.f32.mrf.mxu0
  %v1180 = vadd.f32 0.0, %v1179
  %1181 = vmatmul.bf16.gmra.mxu0 %v1143
  %v1182 = vpop.f32.mrf.mxu0
  %v1183 = vadd.f32 0.0, %v1182
  %v1184 = vpop.f32.mrf.mxu0
  %v1185 = vadd.f32 0.0, %v1184
  %1186 = vmatmul.bf16.gmra.mxu0 %v1146
  %v1187 = vpop.f32.mrf.mxu0
  %v1188 = vadd.f32 0.0, %v1187
  %v1189 = vpop.f32.mrf.mxu0
  %v1190 = vadd.f32 0.0, %v1189
  %1191 = vmatmul.bf16.gmra.mxu0 %v1149
  %v1192 = vpop.f32.mrf.mxu0
  %v1193 = vadd.f32 0.0, %v1192
  %v1194 = vpop.f32.mrf.mxu0
  %v1195 = vadd.f32 0.0, %v1194
  %1196 = vmatmul.bf16.gmra.mxu0 %v1152
  %v1197 = vpop.f32.mrf.mxu0
  %v1198 = vadd.f32 0.0, %v1197
  %v1199 = vpop.f32.mrf.mxu0
  %v1200 = vadd.f32 0.0, %v1199
  %1201 = vmatmul.bf16.gmra.mxu0 %v1155
  %v1202 = vpop.f32.mrf.mxu0
  %v1203 = vadd.f32 0.0, %v1202
  %v1204 = vpop.f32.mrf.mxu0
  %v1205 = vadd.f32 0.0, %v1204
  %1206 = vmatmul.bf16.gmra.mxu0 %v1158
  %v1207 = vpop.f32.mrf.mxu0
  %v1208 = vadd.f32 0.0, %v1207
  %v1209 = vpop.f32.mrf.mxu0
  %v1210 = vadd.f32 0.0, %v1209
  %1211 = vdwg.mxu0
  %v1212 = vadd.f32 %v1062, %v1173
  %v1213 = vadd.f32 %v1063, %v1175
  %v1214 = vadd.f32 %v1064, %v1178
  %v1215 = vadd.f32 %v1065, %v1180
  %v1216 = vadd.f32 %v1066, %v1183
  %v1217 = vadd.f32 %v1067, %v1185
  %v1218 = vadd.f32 %v1068, %v1188
  %v1219 = vadd.f32 %v1069, %v1190
  %v1220 = vadd.f32 %v1070, %v1193
  %v1221 = vadd.f32 %v1071, %v1195
  %v1222 = vadd.f32 %v1072, %v1198
  %v1223 = vadd.f32 %v1073, %v1200
  %v1224 = vadd.f32 %v1074, %v1203
  %v1225 = vadd.f32 %v1075, %v1205
  %v1226 = vadd.f32 %v1076, %v1208
  %v1227 = vadd.f32 %v1077, %v1210
  %v1228 = vld [vmem:[%s8] sm:$0xf]
  %v1229 = vld [vmem:[%s8 + $0x4] sm:$0xf]
  %v1230 = vld [vmem:[%s8 + $0x8] sm:$0xf]
  %v1231 = vld [vmem:[%s8 + $0xc] sm:$0xf]
  %v1232 = vld [vmem:[%s8 + $0x10] sm:$0xf]
  %v1233 = vld [vmem:[%s8 + $0x14] sm:$0xf]
  %v1234 = vld [vmem:[%s8 + $0x18] sm:$0xf]
  %v1235 = vld [vmem:[%s8 + $0x1c] sm:$0xf]
  %v1236 = vld [vmem:[%s8 + $0x20] sm:$0xf]
  %v1237 = vld [vmem:[%s8 + $0x24] sm:$0xf]
  %v1238 = vld [vmem:[%s8 + $0x28] sm:$0xf]
  %v1239 = vld [vmem:[%s8 + $0x2c] sm:$0xf]
  %v1240 = vld [vmem:[%s8 + $0x30] sm:$0xf]
  %v1241 = vld [vmem:[%s8 + $0x34] sm:$0xf]
  %v1242 = vld [vmem:[%s8 + $0x38] sm:$0xf]
  %v1243 = vld [vmem:[%s8 + $0x3c] sm:$0xf]
  %s1244 = scalar_lea.vmem %s9, 32
  %v1245 = vld [vmem:[%s1244] sm:$0x7]
  %v1262 = vunpack.c.l.b16 %v1228
  %v1263 = vunpack.c.l.b16 %v1229
  %v1264 = vunpack.c.l.b16 %v1230
  %v1265 = vunpack.c.l.b16 %v1231
  %v1266 = vunpack.c.l.b16 %v1232
  %v1267 = vunpack.c.l.b16 %v1233
  %v1268 = vunpack.c.l.b16 %v1234
  %v1269 = vunpack.c.l.b16 %v1235
  %v1270 = vunpack.c.l.b16 %v1236
  %v1271 = vunpack.c.l.b16 %v1237
  %v1272 = vunpack.c.l.b16 %v1238
  %v1273 = vunpack.c.l.b16 %v1239
  %v1274 = vunpack.c.l.b16 %v1240
  %v1275 = vunpack.c.l.b16 %v1241
  %v1276 = vunpack.c.l.b16 %v1242
  %v1277 = vunpack.c.l.b16 %v1243
  %v1278 = vpack.c.b16 %v1263, %v1262
  %v1279 = vpack.c.b16 %v1265, %v1264
  %v1280 = vpack.c.b16 %v1267, %v1266
  %v1281 = vpack.c.b16 %v1269, %v1268
  %v1282 = vpack.c.b16 %v1271, %v1270
  %v1283 = vpack.c.b16 %v1273, %v1272
  %v1284 = vpack.c.b16 %v1275, %v1274
  %v1285 = vpack.c.b16 %v1277, %v1276
  %v1287 = vsel %vm100, %v1278, 0
  %v1290 = vsel %vm100, %v1279, 0
  %v1293 = vsel %vm100, %v1280, 0
  %v1296 = vsel %vm100, %v1281, 0
  %v1299 = vsel %vm100, %v1282, 0
  %v1302 = vsel %vm100, %v1283, 0
  %v1305 = vsel %vm100, %v1284, 0
  %v1308 = vsel %vm100, %v1285, 0
  %v1311 = vsel %vm125, %v1245, 0
  %1313 = vmatpush.bf16.msra.mxu0 0
  %1314 = vmatpush.bf16.msra.mxu0 0
  %1315 = vmatpush.bf16.msra.mxu0 0
  %1316 = vmatpush.bf16.msra.mxu0 0
  %1317 = vmatpush.bf16.msra.mxu0 0
  %1318 = vmatpush.bf16.msra.mxu0 0
  %1319 = vmatpush.bf16.msra.mxu0 0
  %1320 = vmatpush.bf16.msra.mxu0 %v1311
  %1321 = vmatmul.bf16.gmra.mxu0 %v1287
  %v1322 = vpop.f32.mrf.mxu0
  %v1323 = vadd.f32 0.0, %v1322
  %v1324 = vpop.f32.mrf.mxu0
  %v1325 = vadd.f32 0.0, %v1324
  %1326 = vmatmul.bf16.gmra.mxu0 %v1290
  %v1327 = vpop.f32.mrf.mxu0
  %v1328 = vadd.f32 0.0, %v1327
  %v1329 = vpop.f32.mrf.mxu0
  %v1330 = vadd.f32 0.0, %v1329
  %1331 = vmatmul.bf16.gmra.mxu0 %v1293
  %v1332 = vpop.f32.mrf.mxu0
  %v1333 = vadd.f32 0.0, %v1332
  %v1334 = vpop.f32.mrf.mxu0
  %v1335 = vadd.f32 0.0, %v1334
  %1336 = vmatmul.bf16.gmra.mxu0 %v1296
  %v1337 = vpop.f32.mrf.mxu0
  %v1338 = vadd.f32 0.0, %v1337
  %v1339 = vpop.f32.mrf.mxu0
  %v1340 = vadd.f32 0.0, %v1339
  %1341 = vmatmul.bf16.gmra.mxu0 %v1299
  %v1342 = vpop.f32.mrf.mxu0
  %v1343 = vadd.f32 0.0, %v1342
  %v1344 = vpop.f32.mrf.mxu0
  %v1345 = vadd.f32 0.0, %v1344
  %1346 = vmatmul.bf16.gmra.mxu0 %v1302
  %v1347 = vpop.f32.mrf.mxu0
  %v1348 = vadd.f32 0.0, %v1347
  %v1349 = vpop.f32.mrf.mxu0
  %v1350 = vadd.f32 0.0, %v1349
  %1351 = vmatmul.bf16.gmra.mxu0 %v1305
  %v1352 = vpop.f32.mrf.mxu0
  %v1353 = vadd.f32 0.0, %v1352
  %v1354 = vpop.f32.mrf.mxu0
  %v1355 = vadd.f32 0.0, %v1354
  %1356 = vmatmul.bf16.gmra.mxu0 %v1308
  %v1357 = vpop.f32.mrf.mxu0
  %v1358 = vadd.f32 0.0, %v1357
  %v1359 = vpop.f32.mrf.mxu0
  %v1360 = vadd.f32 0.0, %v1359
  %1361 = vdwg.mxu0
  %v1362 = vadd.f32 %v1212, %v1323
  %v1363 = vadd.f32 %v1213, %v1325
  %v1364 = vadd.f32 %v1214, %v1328
  %v1365 = vadd.f32 %v1215, %v1330
  %v1366 = vadd.f32 %v1216, %v1333
  %v1367 = vadd.f32 %v1217, %v1335
  %v1368 = vadd.f32 %v1218, %v1338
  %v1369 = vadd.f32 %v1219, %v1340
  %v1370 = vadd.f32 %v1220, %v1343
  %v1371 = vadd.f32 %v1221, %v1345
  %v1372 = vadd.f32 %v1222, %v1348
  %v1373 = vadd.f32 %v1223, %v1350
  %v1374 = vadd.f32 %v1224, %v1353
  %v1375 = vadd.f32 %v1225, %v1355
  %v1376 = vadd.f32 %v1226, %v1358
  %v1377 = vadd.f32 %v1227, %v1360
  %v1378 = vmax.f32 %v1362, 0.0
  %v1379 = vmax.f32 %v1363, 0.0
  %v1380 = vmax.f32 %v1364, 0.0
  %v1381 = vmax.f32 %v1365, 0.0
  %v1382 = vmax.f32 %v1366, 0.0
  %v1383 = vmax.f32 %v1367, 0.0
  %v1384 = vmax.f32 %v1368, 0.0
  %v1385 = vmax.f32 %v1369, 0.0
  %v1386 = vmax.f32 %v1370, 0.0
  %v1387 = vmax.f32 %v1371, 0.0
  %v1388 = vmax.f32 %v1372, 0.0
  %v1389 = vmax.f32 %v1373, 0.0
  %v1390 = vmax.f32 %v1374, 0.0
  %v1391 = vmax.f32 %v1375, 0.0
  %v1392 = vmax.f32 %v1376, 0.0
  %v1393 = vmax.f32 %v1377, 0.0
  %1394 = vst [vmem:[%s11] sm:$0xff] %v1378
  %1395 = vst [vmem:[%s11 + $0x8] sm:$0xff] %v1379
  %1396 = vst [vmem:[%s11 + $0x10] sm:$0xff] %v1380
  %1397 = vst [vmem:[%s11 + $0x18] sm:$0xff] %v1381
  %1398 = vst [vmem:[%s11 + $0x20] sm:$0xff] %v1382
  %1399 = vst [vmem:[%s11 + $0x28] sm:$0xff] %v1383
  %1400 = vst [vmem:[%s11 + $0x30] sm:$0xff] %v1384
  %1401 = vst [vmem:[%s11 + $0x38] sm:$0xff] %v1385
  %1402 = vst [vmem:[%s11 + $0x40] sm:$0xff] %v1386
  %1403 = vst [vmem:[%s11 + $0x48] sm:$0xff] %v1387
  %1404 = vst [vmem:[%s11 + $0x50] sm:$0xff] %v1388
  %1405 = vst [vmem:[%s11 + $0x58] sm:$0xff] %v1389
  %1406 = vst [vmem:[%s11 + $0x60] sm:$0xff] %v1390
  %1407 = vst [vmem:[%s11 + $0x68] sm:$0xff] %v1391
  %1408 = vst [vmem:[%s11 + $0x70] sm:$0xff] %v1392
  %1409 = vst [vmem:[%s11 + $0x78] sm:$0xff] %v1393
  // Predicated region
  $region46: #{vonet_forward.4} parent=0 // pred_check
    _
  $region47: #{vonet_forward.4} parent=0 // pred_check_branch
    %1411 = sbr.rel (0) target = $region49
  $region48: #{vonet_forward.4} parent=0 // pred_region
    _
  $region49: #{vonet_forward.4} parent=0 // pred_fallthru
    _
  // Predicated region
  $region50: #{vonet_forward.4} parent=0 // pred_check
    _
  $region51: #{vonet_forward.4} parent=0 // pred_check_branch
    %1413 = sbr.rel (0) target = $region53
  $region52: #{vonet_forward.4} parent=0 // pred_region
    _
  $region53: #{vonet_forward.4} parent=0 // pred_fallthru
    _

// kernel: vonet_forward.7
$region0: #{vonet_forward.7}
  #allocation0 [shape = 'u32[]', space=smem, size = 0x4, offset = 0x4, fixed_abs, tag = 'smem constant byte address 0x4 - core index']
  #allocation1 [shape = 'u32[72,128]{1,0:T(1,128)}', space=vmem, size = 0x9000, scoped, tag = 'internal scratch']
  %s0 = inlined_call_operand.vmem [shape: f32[2,4,32], index: 0, kind: input, shape index: {}]
  %s1 = inlined_call_operand.vmem [shape: f32[32,128], index: 1, kind: input, shape index: {}]
  %s2 = inlined_call_operand.vmem [shape: f32[1,128], index: 2, kind: input, shape index: {}]
  %s3 = inlined_call_operand.hbm [shape: f32[2,128], index: 3, kind: output, shape index: {}]
  %s4 = sld [smem:[#allocation0]]
  $region22: #{vonet_forward.7} parent=0
    _
  %s6 = ssub.s32 1, %s4
  %s7 = scalar_select 0, %s6, %s4
  $region1: #{vonet_forward.7} parent=0
    #allocation2 [shape = 'u8[1024]{0}', space=vmem, size = 0x400, scoped, tag = 'output window, operand 0, single buffered']
    #allocation3 [shape = 's32[1]{0}', space=sflag, size = 0x4, scoped, tag = 'scoped memory for vonet_forward.7']
    %8 = vsyncpa [#allocation3], 0
    // Predicated region
    $region2: #{vonet_forward.7} parent=1 // pred_check
      _
    $region3: #{vonet_forward.7} parent=1 // pred_check_branch
      %10 = sbr.rel (0) target = $region5
    $region4: #{vonet_forward.7} parent=1 // pred_region
      _
    $region5: #{vonet_forward.7} parent=1 // pred_fallthru
      _
    // Predicated region
    $region6: #{vonet_forward.7} parent=1 // pred_check
      _
    $region7: #{vonet_forward.7} parent=1 // pred_check_branch
      %12 = sbr.rel (0) target = $region9
    $region8: #{vonet_forward.7} parent=1 // pred_region
      _
    $region9: #{vonet_forward.7} parent=1 // pred_fallthru
      _
    // Predicated region
    $region10: #{vonet_forward.7} parent=1 // pred_check
      _
    $region11: #{vonet_forward.7} parent=1 // pred_check_branch
      %14 = sbr.rel (0) target = $region13
    $region12: #{vonet_forward.7} parent=1 // pred_region
      _
    $region13: #{vonet_forward.7} parent=1 // pred_fallthru
      _
    %v15 = vld [vmem:[%s0] sm:$0xf]
    %v16 = vld [vmem:[%s0 + $0x4] sm:$0xf]
    %vm17 = vcmask 257024
    %v18 = vsel %vm17, %v15, 0.0
    %v19 = vrot.slane %v18, 4
    %v20 = vadd.f32 %v18, %v19
    %v21 = vrot.slane %v20, 2
    %v22 = vadd.f32 %v20, %v21
    %v23 = vrot.slane %v22, 1
    %v24 = vadd.f32 %v22, %v23
    %v25 = vsel %vm17, %v16, 0.0
    %v26 = vrot.slane %v25, 4
    %v27 = vadd.f32 %v25, %v26
    %v28 = vrot.slane %v27, 2
    %v29 = vadd.f32 %v27, %v28
    %v30 = vrot.slane %v29, 1
    %v31 = vadd.f32 %v29, %v30
    %v32 = vrcp.pop 4.0
    %v33 = vmul.f32 4.0, %v32
    %v34 = vsub.f32 1.0, %v33
    %v35 = vmul.f32 %v32, %v34
    %v36 = vadd.f32 %v32, %v35
    %vm37 = vweird.f32 %v32
    %v38 = vsel %vm37, %v32, %v36
    %v39 = vmul.f32 %v24, %v38
    %v40 = vmul.f32 %v31, %v38
    %v41 = vld [vmem:[%s1] sm:$0xff]
    %v42 = vld [vmem:[%s1 + $0x8] sm:$0xff]
    %v43 = vld [vmem:[%s1 + $0x10] sm:$0xff]
    %v44 = vld [vmem:[%s1 + $0x18] sm:$0xff]
    %v45 = vld [vmem:[%s2] sm:$0x1]
    %v47 = vperm.slane %v45, 0
    %vm51 = vcmask 1041409
    %v52 = vsel %vm51, %v40, %v39
    %vm53 = vcmask 261120
    %v54 = vsel %vm53, %v52, 0
    %56 = vmatpush.msra.mxu0 0.0
    %57 = vmatpush.msra.mxu0 0.0
    %58 = vmatpush.msra.mxu0 0.0
    %59 = vmatpush.msra.mxu0 0.0
    %60 = vmatpush.msra.mxu0 0.0
    %61 = vmatpush.msra.mxu0 0.0
    %62 = vmatpush.msra.mxu0 0.0
    %63 = vmatpush.msra.mxu0 0.0
    %64 = vmatpush.msra.mxu0 0.0
    %65 = vmatpush.msra.mxu0 0.0
    %66 = vmatpush.msra.mxu0 0.0
    %67 = vmatpush.msra.mxu0 0.0
    %68 = vmatpush.msra.mxu0 %v44
    %69 = vmatpush.msra.mxu0 %v43
    %70 = vmatpush.msra.mxu0 %v42
    %71 = vmatpush.msra.mxu0 %v41
    %72 = vmatmul.f32.gmra.mxu0 %v54
    %v73 = vpop.f32.mrf.mxu0
    %v74 = vadd.f32 %v47, %v73
    %75 = vdwg.mxu0
    %76 = vst [vmem:[#allocation2] sm:$0x3] %v74
    // Predicated region
    $region14: #{vonet_forward.7} parent=1 // pred_check
      _
    $region15: #{vonet_forward.7} parent=1 // pred_check_branch
      %78 = sbr.rel (0) target = $region17
    $region16: #{vonet_forward.7} parent=1 // pred_region
      %80 = vsyncadd [#allocation3], 0
      %s82 = sshll.u32 [#allocation2], 4
      %s83 = int_to_ptr.vmem [resolvable:$true] %s82
      %s84 = sshll.u32 %s3, 4
      %s85 = int_to_ptr.hbm [resolvable:$true] %s84
      %87 = dma.vmem_to_hbm [thread:$0]  %s83, 32, %s85, [#allocation3]
    $region17: #{vonet_forward.7} parent=1 // pred_fallthru
      _
    // Predicated region
    $region18: #{vonet_forward.7} parent=1 // pred_check
      _
    $region19: #{vonet_forward.7} parent=1 // pred_check_branch
      %89 = sbr.rel (0) target = $region21
    $region20: #{vonet_forward.7} parent=1 // pred_region
      %91 = dma.done [#allocation3], 32
    $region21: #{vonet_forward.7} parent=1 // pred_fallthru
      _
    %92 = vsyncpa [#allocation3], 1

// kernel: vonet_forward.6
$region0: #{vonet_forward.6}
  #allocation0 [shape = 'u32[]', space=smem, size = 0x4, offset = 0x4, fixed_abs, tag = 'smem constant byte address 0x4 - core index']
  #allocation1 [shape = 'u32[72,128]{1,0:T(1,128)}', space=vmem, size = 0x9000, scoped, tag = 'internal scratch']
  %s0 = inlined_call_operand.vmem [shape: bf16[8,4], index: 0, kind: input, shape index: {}]
  %s1 = inlined_call_operand.vmem [shape: bf16[8,4], index: 1, kind: input, shape index: {}]
  %s2 = inlined_call_operand.vmem [shape: bf16[8,4], index: 2, kind: input, shape index: {}]
  %s3 = inlined_call_operand.vmem [shape: bf16[8,4], index: 3, kind: input, shape index: {}]
  %s4 = inlined_call_operand.vmem [shape: bf16[8,4], index: 4, kind: input, shape index: {}]
  %s5 = inlined_call_operand.vmem [shape: bf16[8,4], index: 5, kind: input, shape index: {}]
  %s6 = inlined_call_operand.vmem [shape: bf16[8,4], index: 6, kind: input, shape index: {}]
  %s7 = inlined_call_operand.vmem [shape: bf16[8,4], index: 7, kind: input, shape index: {}]
  %s8 = inlined_call_operand.vmem [shape: bf16[8,4], index: 8, kind: input, shape index: {}]
  %s9 = inlined_call_operand.vmem [shape: bf16[9,4,128], index: 9, kind: input, shape index: {}]
  %s10 = inlined_call_operand.vmem [shape: f32[1,128], index: 10, kind: input, shape index: {}]
  %s11 = inlined_call_operand.vmem [shape: f32[8,128], index: 11, kind: output, shape index: {}]
  %s12 = sld [smem:[#allocation0]]
  $region54: #{vonet_forward.6} parent=0
    _
  %s14 = ssub.s32 1, %s12
  %s15 = scalar_select 0, %s14, %s12
  // Predicated region
  $region2: #{vonet_forward.6} parent=0 // pred_check
    _
  $region3: #{vonet_forward.6} parent=0 // pred_check_branch
    %17 = sbr.rel (0) target = $region5
  $region4: #{vonet_forward.6} parent=0 // pred_region
    _
  $region5: #{vonet_forward.6} parent=0 // pred_fallthru
    _
  // Predicated region
  $region6: #{vonet_forward.6} parent=0 // pred_check
    _
  $region7: #{vonet_forward.6} parent=0 // pred_check_branch
    %19 = sbr.rel (0) target = $region9
  $region8: #{vonet_forward.6} parent=0 // pred_region
    _
  $region9: #{vonet_forward.6} parent=0 // pred_fallthru
    _
  // Predicated region
  $region10: #{vonet_forward.6} parent=0 // pred_check
    _
  $region11: #{vonet_forward.6} parent=0 // pred_check_branch
    %21 = sbr.rel (0) target = $region13
  $region12: #{vonet_forward.6} parent=0 // pred_region
    _
  $region13: #{vonet_forward.6} parent=0 // pred_fallthru
    _
  // Predicated region
  $region14: #{vonet_forward.6} parent=0 // pred_check
    _
  $region15: #{vonet_forward.6} parent=0 // pred_check_branch
    %23 = sbr.rel (0) target = $region17
  $region16: #{vonet_forward.6} parent=0 // pred_region
    _
  $region17: #{vonet_forward.6} parent=0 // pred_fallthru
    _
  // Predicated region
  $region18: #{vonet_forward.6} parent=0 // pred_check
    _
  $region19: #{vonet_forward.6} parent=0 // pred_check_branch
    %25 = sbr.rel (0) target = $region21
  $region20: #{vonet_forward.6} parent=0 // pred_region
    _
  $region21: #{vonet_forward.6} parent=0 // pred_fallthru
    _
  // Predicated region
  $region22: #{vonet_forward.6} parent=0 // pred_check
    _
  $region23: #{vonet_forward.6} parent=0 // pred_check_branch
    %27 = sbr.rel (0) target = $region25
  $region24: #{vonet_forward.6} parent=0 // pred_region
    _
  $region25: #{vonet_forward.6} parent=0 // pred_fallthru
    _
  // Predicated region
  $region26: #{vonet_forward.6} parent=0 // pred_check
    _
  $region27: #{vonet_forward.6} parent=0 // pred_check_branch
    %29 = sbr.rel (0) target = $region29
  $region28: #{vonet_forward.6} parent=0 // pred_region
    _
  $region29: #{vonet_forward.6} parent=0 // pred_fallthru
    _
  // Predicated region
  $region30: #{vonet_forward.6} parent=0 // pred_check
    _
  $region31: #{vonet_forward.6} parent=0 // pred_check_branch
    %31 = sbr.rel (0) target = $region33
  $region32: #{vonet_forward.6} parent=0 // pred_region
    _
  $region33: #{vonet_forward.6} parent=0 // pred_fallthru
    _
  // Predicated region
  $region34: #{vonet_forward.6} parent=0 // pred_check
    _
  $region35: #{vonet_forward.6} parent=0 // pred_check_branch
    %33 = sbr.rel (0) target = $region37
  $region36: #{vonet_forward.6} parent=0 // pred_region
    _
  $region37: #{vonet_forward.6} parent=0 // pred_fallthru
    _
  // Predicated region
  $region38: #{vonet_forward.6} parent=0 // pred_check
    _
  $region39: #{vonet_forward.6} parent=0 // pred_check_branch
    %35 = sbr.rel (0) target = $region41
  $region40: #{vonet_forward.6} parent=0 // pred_region
    _
  $region41: #{vonet_forward.6} parent=0 // pred_fallthru
    _
  // Predicated region
  $region42: #{vonet_forward.6} parent=0 // pred_check
    _
  $region43: #{vonet_forward.6} parent=0 // pred_check_branch
    %37 = sbr.rel (0) target = $region45
  $region44: #{vonet_forward.6} parent=0 // pred_region
    _
  $region45: #{vonet_forward.6} parent=0 // pred_fallthru
    _
  %v39 = vld [vmem:[%s0] sm:$0xf]
  %v40 = vld [vmem:[%s9] sm:$0x3]
  %v41 = vld [vmem:[%s10] sm:$0x1]
  %v43 = vperm.slane %v41, 0
  %vm45 = vcmask 31744
  %v47 = vsel %vm45, %v39, 0
  %vm49 = vcmask 1041408
  %v51 = vsel %vm49, %v40, 0
  %53 = vmatpush.bf16.msra.mxu0 0
  %54 = vmatpush.bf16.msra.mxu0 0
  %55 = vmatpush.bf16.msra.mxu0 0
  %56 = vmatpush.bf16.msra.mxu0 0
  %57 = vmatpush.bf16.msra.mxu0 0
  %58 = vmatpush.bf16.msra.mxu0 0
  %59 = vmatpush.bf16.msra.mxu0 0
  %60 = vmatpush.bf16.msra.mxu0 %v51
  %61 = vmatmul.bf16.gmra.mxu0 %v47
  %v62 = vpop.f32.mrf.mxu0
  %v63 = vadd.f32 %v43, %v62
  %v64 = vpop.f32.mrf.mxu0
  %65 = vdwg.mxu0
  %v66 = vld [vmem:[%s1] sm:$0xf]
  %s67 = scalar_lea.vmem %s9, 2
  %v68 = vld [vmem:[%s67] sm:$0x3]
  %v70 = vsel %vm45, %v66, 0
  %v73 = vsel %vm49, %v68, 0
  %75 = vmatpush.bf16.msra.mxu0 0
  %76 = vmatpush.bf16.msra.mxu0 0
  %77 = vmatpush.bf16.msra.mxu0 0
  %78 = vmatpush.bf16.msra.mxu0 0
  %79 = vmatpush.bf16.msra.mxu0 0
  %80 = vmatpush.bf16.msra.mxu0 0
  %81 = vmatpush.bf16.msra.mxu0 0
  %82 = vmatpush.bf16.msra.mxu0 %v73
  %83 = vmatmul.bf16.gmra.mxu0 %v70
  %v84 = vpop.f32.mrf.mxu0
  %v85 = vadd.f32 0.0, %v84
  %v86 = vpop.f32.mrf.mxu0
  %87 = vdwg.mxu0
  %v88 = vadd.f32 %v63, %v85
  %v89 = vld [vmem:[%s2] sm:$0xf]
  %s90 = scalar_lea.vmem %s9, 4
  %v91 = vld [vmem:[%s90] sm:$0x3]
  %v93 = vsel %vm45, %v89, 0
  %v96 = vsel %vm49, %v91, 0
  %98 = vmatpush.bf16.msra.mxu0 0
  %99 = vmatpush.bf16.msra.mxu0 0
  %100 = vmatpush.bf16.msra.mxu0 0
  %101 = vmatpush.bf16.msra.mxu0 0
  %102 = vmatpush.bf16.msra.mxu0 0
  %103 = vmatpush.bf16.msra.mxu0 0
  %104 = vmatpush.bf16.msra.mxu0 0
  %105 = vmatpush.bf16.msra.mxu0 %v96
  %106 = vmatmul.bf16.gmra.mxu0 %v93
  %v107 = vpop.f32.mrf.mxu0
  %v108 = vadd.f32 0.0, %v107
  %v109 = vpop.f32.mrf.mxu0
  %110 = vdwg.mxu0
  %v111 = vadd.f32 %v88, %v108
  %v112 = vld [vmem:[%s3] sm:$0xf]
  %s113 = scalar_lea.vmem %s9, 6
  %v114 = vld [vmem:[%s113] sm:$0x3]
  %v116 = vsel %vm45, %v112, 0
  %v119 = vsel %vm49, %v114, 0
  %121 = vmatpush.bf16.msra.mxu0 0
  %122 = vmatpush.bf16.msra.mxu0 0
  %123 = vmatpush.bf16.msra.mxu0 0
  %124 = vmatpush.bf16.msra.mxu0 0
  %125 = vmatpush.bf16.msra.mxu0 0
  %126 = vmatpush.bf16.msra.mxu0 0
  %127 = vmatpush.bf16.msra.mxu0 0
  %128 = vmatpush.bf16.msra.mxu0 %v119
  %129 = vmatmul.bf16.gmra.mxu0 %v116
  %v130 = vpop.f32.mrf.mxu0
  %v131 = vadd.f32 0.0, %v130
  %v132 = vpop.f32.mrf.mxu0
  %133 = vdwg.mxu0
  %v134 = vadd.f32 %v111, %v131
  %v135 = vld [vmem:[%s4] sm:$0xf]
  %s136 = scalar_lea.vmem %s9, 8
  %v137 = vld [vmem:[%s136] sm:$0x3]
  %v139 = vsel %vm45, %v135, 0
  %v142 = vsel %vm49, %v137, 0
  %144 = vmatpush.bf16.msra.mxu0 0
  %145 = vmatpush.bf16.msra.mxu0 0
  %146 = vmatpush.bf16.msra.mxu0 0
  %147 = vmatpush.bf16.msra.mxu0 0
  %148 = vmatpush.bf16.msra.mxu0 0
  %149 = vmatpush.bf16.msra.mxu0 0
  %150 = vmatpush.bf16.msra.mxu0 0
  %151 = vmatpush.bf16.msra.mxu0 %v142
  %152 = vmatmul.bf16.gmra.mxu0 %v139
  %v153 = vpop.f32.mrf.mxu0
  %v154 = vadd.f32 0.0, %v153
  %v155 = vpop.f32.mrf.mxu0
  %156 = vdwg.mxu0
  %v157 = vadd.f32 %v134, %v154
  %v158 = vld [vmem:[%s5] sm:$0xf]
  %s159 = scalar_lea.vmem %s9, 10
  %v160 = vld [vmem:[%s159] sm:$0x3]
  %v162 = vsel %vm45, %v158, 0
  %v165 = vsel %vm49, %v160, 0
  %167 = vmatpush.bf16.msra.mxu0 0
  %168 = vmatpush.bf16.msra.mxu0 0
  %169 = vmatpush.bf16.msra.mxu0 0
  %170 = vmatpush.bf16.msra.mxu0 0
  %171 = vmatpush.bf16.msra.mxu0 0
  %172 = vmatpush.bf16.msra.mxu0 0
  %173 = vmatpush.bf16.msra.mxu0 0
  %174 = vmatpush.bf16.msra.mxu0 %v165
  %175 = vmatmul.bf16.gmra.mxu0 %v162
  %v176 = vpop.f32.mrf.mxu0
  %v177 = vadd.f32 0.0, %v176
  %v178 = vpop.f32.mrf.mxu0
  %179 = vdwg.mxu0
  %v180 = vadd.f32 %v157, %v177
  %v181 = vld [vmem:[%s6] sm:$0xf]
  %s182 = scalar_lea.vmem %s9, 12
  %v183 = vld [vmem:[%s182] sm:$0x3]
  %v185 = vsel %vm45, %v181, 0
  %v188 = vsel %vm49, %v183, 0
  %190 = vmatpush.bf16.msra.mxu0 0
  %191 = vmatpush.bf16.msra.mxu0 0
  %192 = vmatpush.bf16.msra.mxu0 0
  %193 = vmatpush.bf16.msra.mxu0 0
  %194 = vmatpush.bf16.msra.mxu0 0
  %195 = vmatpush.bf16.msra.mxu0 0
  %196 = vmatpush.bf16.msra.mxu0 0
  %197 = vmatpush.bf16.msra.mxu0 %v188
  %198 = vmatmul.bf16.gmra.mxu0 %v185
  %v199 = vpop.f32.mrf.mxu0
  %v200 = vadd.f32 0.0, %v199
  %v201 = vpop.f32.mrf.mxu0
  %202 = vdwg.mxu0
  %v203 = vadd.f32 %v180, %v200
  %v204 = vld [vmem:[%s7] sm:$0xf]
  %s205 = scalar_lea.vmem %s9, 14
  %v206 = vld [vmem:[%s205] sm:$0x3]
  %v208 = vsel %vm45, %v204, 0
  %v211 = vsel %vm49, %v206, 0
  %213 = vmatpush.bf16.msra.mxu0 0
  %214 = vmatpush.bf16.msra.mxu0 0
  %215 = vmatpush.bf16.msra.mxu0 0
  %216 = vmatpush.bf16.msra.mxu0 0
  %217 = vmatpush.bf16.msra.mxu0 0
  %218 = vmatpush.bf16.msra.mxu0 0
  %219 = vmatpush.bf16.msra.mxu0 0
  %220 = vmatpush.bf16.msra.mxu0 %v211
  %221 = vmatmul.bf16.gmra.mxu0 %v208
  %v222 = vpop.f32.mrf.mxu0
  %v223 = vadd.f32 0.0, %v222
  %v224 = vpop.f32.mrf.mxu0
  %225 = vdwg.mxu0
  %v226 = vadd.f32 %v203, %v223
  %v227 = vld [vmem:[%s8] sm:$0xf]
  %s228 = scalar_lea.vmem %s9, 16
  %v229 = vld [vmem:[%s228] sm:$0x3]
  %v231 = vsel %vm45, %v227, 0
  %v234 = vsel %vm49, %v229, 0
  %236 = vmatpush.bf16.msra.mxu0 0
  %237 = vmatpush.bf16.msra.mxu0 0
  %238 = vmatpush.bf16.msra.mxu0 0
  %239 = vmatpush.bf16.msra.mxu0 0
  %240 = vmatpush.bf16.msra.mxu0 0
  %241 = vmatpush.bf16.msra.mxu0 0
  %242 = vmatpush.bf16.msra.mxu0 0
  %243 = vmatpush.bf16.msra.mxu0 %v234
  %244 = vmatmul.bf16.gmra.mxu0 %v231
  %v245 = vpop.f32.mrf.mxu0
  %v246 = vadd.f32 0.0, %v245
  %v247 = vpop.f32.mrf.mxu0
  %248 = vdwg.mxu0
  %v249 = vadd.f32 %v226, %v246
  %v250 = vmax.f32 %v249, 0.0
  %251 = vst [vmem:[%s11] sm:$0xff] %v250
  // Predicated region
  $region46: #{vonet_forward.6} parent=0 // pred_check
    _
  $region47: #{vonet_forward.6} parent=0 // pred_check_branch
    %253 = sbr.rel (0) target = $region49
  $region48: #{vonet_forward.6} parent=0 // pred_region
    _
  $region49: #{vonet_forward.6} parent=0 // pred_fallthru
    _
  // Predicated region
  $region50: #{vonet_forward.6} parent=0 // pred_check
    _
  $region51: #{vonet_forward.6} parent=0 // pred_check_branch
    %255 = sbr.rel (0) target = $region53
  $region52: #{vonet_forward.6} parent=0 // pred_region
    _
  $region53: #{vonet_forward.6} parent=0 // pred_fallthru
    _

</llo_original>
